<compile_context>
chip_gen: v5e
topology: v5e:2x2
jax: 0.10.0
libtpu: 0.0.40
codegen_flags: <defaults>
</compile_context>

<pallas_src>
import math

import jax
import jax.numpy as jnp
from jax import lax
from jax.experimental import pallas as pl
from jax.experimental.pallas import tpu as pltpu

# ----------------------------------------------------------------------------
# Config (mirrors the PyTorch module's __init__ arguments, small & synthetic)
# ----------------------------------------------------------------------------
SAMPLE_RATE = 16000
MEL_CFG = dict(n_fft=[64], win_length=[64], hop_length=[16], n_mels=[16],
               f_min=0.0, f_max=8000.0, preemph=0.97)
REG = dict(rec=10.0, kl=1.0, sia=1.0, mi=0.0)

CONTENT_DIM = 32   # synthetic core: content latent width  (mu / log_sigma)
SPK_DIM = 32       # synthetic core: speaker-embedding width (emb / emb_)


# ----------------------------------------------------------------------------
# Mel filterbank / DFT setup (deterministic, plain JAX glue, built once)
# ----------------------------------------------------------------------------
def hz_to_mel(f):
    return 2595.0 * jnp.log10(1.0 + f / 700.0)


def mel_to_hz(m):
    return 700.0 * (10.0 ** (m / 2595.0) - 1.0)


def make_mel_matrices(n_fft, win_length, n_mels, f_min, f_max, sr):
    """Windowed real-DFT cos/sin matrices + HTK mel filterbank (bf16 operands)."""
    assert win_length == n_fft
    n_freq = n_fft // 2 + 1
    n = jnp.arange(n_fft, dtype=jnp.float32)
    window = 0.5 * (1.0 - jnp.cos(2.0 * jnp.pi * n / win_length))  # periodic Hann
    k = jnp.arange(n_freq, dtype=jnp.float32)
    ang = 2.0 * jnp.pi * n[:, None] * k[None, :] / n_fft
    cos_m = window[:, None] * jnp.cos(ang)                          # (n_fft, n_freq)
    sin_m = window[:, None] * (-jnp.sin(ang))
    all_freqs = jnp.linspace(0.0, sr / 2.0, n_freq)
    m_pts = jnp.linspace(hz_to_mel(f_min), hz_to_mel(f_max), n_mels + 2)
    f_pts = mel_to_hz(m_pts)
    f_diff = f_pts[1:] - f_pts[:-1]
    slopes = f_pts[None, :] - all_freqs[:, None]                    # (n_freq, n_mels+2)
    down = -slopes[:, :-2] / f_diff[:-1]
    up = slopes[:, 2:] / f_diff[1:]
    fb = jnp.maximum(0.0, jnp.minimum(down, up))                    # (n_freq, n_mels)
    # bf16 operands -> single-pass MXU + half the DMA; accumulation stays f32.
    return (cos_m.astype(jnp.bfloat16), sin_m.astype(jnp.bfloat16),
            fb.astype(jnp.bfloat16))


def init_params(key):
    mel_mats = [make_mel_matrices(MEL_CFG['n_fft'][i], MEL_CFG['win_length'][i],
                                  MEL_CFG['n_mels'][i], MEL_CFG['f_min'],
                                  MEL_CFG['f_max'], SAMPLE_RATE)
                for i in range(len(MEL_CFG['n_fft']))]
    M, C, E = MEL_CFG['n_mels'][0], CONTENT_DIM, SPK_DIM
    ks = jax.random.split(key, 5)

    def w(k_, shape, fan_in):
        return jax.random.normal(k_, shape, jnp.float32) / math.sqrt(fan_in)

    core = dict(
        w_mu=w(ks[0], (M, C), M), b_mu=jnp.zeros((1, C), jnp.float32),
        w_ls=w(ks[1], (M, C), M), b_ls=jnp.zeros((1, C), jnp.float32),
        w_spk=w(ks[2], (M, E), M), b_spk=jnp.zeros((1, E), jnp.float32),
        w_dc=w(ks[3], (C, M), C), w_ds=w(ks[4], (E, M), E),
        b_dec=jnp.zeros((1, M), jnp.float32),
    )
    return dict(mel=mel_mats, core=core)


# ----------------------------------------------------------------------------
# JAX glue: preemphasis (lfilter a=[1,0], b=[1,-p]) and gather-free framing
# ----------------------------------------------------------------------------
def preemphasis(audio, coef):
    prev = jnp.pad(audio, ((0, 0), (1, 0)))[:, :-1]
    return audio - coef * prev


def frame_audio(audio, n_fft, hop):
    """center=True reflect-padded framing (torch.stft convention).

    Built from shifted hop-block views + one concat -- no XLA gather.
    """
    assert n_fft % hop == 0
    pad = n_fft // 2
    padded = jnp.pad(audio, ((0, 0), (pad, pad)), mode='reflect')
    n_frames = 1 + (padded.shape[1] - n_fft) // hop
    r = n_fft // hop
    nb = n_frames + r - 1
    blocks = padded[:, :nb * hop].reshape(audio.shape[0], nb, hop)
    frames = jnp.concatenate([blocks[:, j:j + n_frames, :] for j in range(r)],
                             axis=-1)                       # (B, n_frames, n_fft)
    return frames.astype(jnp.float32)


# ----------------------------------------------------------------------------
# Single fused Pallas kernel:
#   frames -> re/im -> |.| -> mel -> log, content encoder, speaker encoder
#   + per-utterance pooling, decoder, fused rec/KL/cosine loss.
# ----------------------------------------------------------------------------
def vc_fused_pallas(frames_all, cos_m, sin_m, fb, core, B, T):
    n_mels = fb.shape[1]
    BT = B * T

    def kernel(frames_ref, cos_ref, sin_ref, fb_ref,
               wmu_ref, bmu_ref, wls_ref, bls_ref,
               wspk_ref, bspk_ref, wdc_ref, wds_ref, bdec_ref,
               dec_ref, loss_ref):
        # ---- log-mel front end (audio + ref folded into the 2BT row dim) ----
        fr = frames_ref[...]                                                # (2BT, n_fft) bf16
        re = jnp.dot(fr, cos_ref[...], preferred_element_type=jnp.float32)  # (2BT, n_freq)
        im = jnp.dot(fr, sin_ref[...], preferred_element_type=jnp.float32)
        mag = jnp.sqrt(re * re + im * im + 1e-12)            # power=1 magnitude (+eps for grads)
        mel = jnp.dot(mag.astype(jnp.bfloat16), fb_ref[...],
                      preferred_element_type=jnp.float32)                   # (2BT, M)
        log_mel = jnp.log(mel + 1e-9)

        x = log_mel[:BT, :]                                                 # audio log-mel

        # ---- content encoder: two aligned projections (no packed lane slice) ----
        mu = jnp.dot(x, wmu_ref[...], preferred_element_type=jnp.float32) + bmu_ref[...]
        log_sigma = (jnp.dot(x, wls_ref[...], preferred_element_type=jnp.float32)
                     + bls_ref[...])

        # ---- speaker encoder: per-frame MLP, then per-utterance mean pool ----
        # time_shuffle elided: a per-frame MLP followed by mean pooling is
        # invariant to within-utterance frame permutations, so the pooled
        # embeddings are identical with or without the shuffle.
        spk = jnp.tanh(jnp.dot(log_mel, wspk_ref[...],
                               preferred_element_type=jnp.float32)
                       + bspk_ref[...])                                     # (2BT, E)
        pooled = [jnp.mean(spk[u * T:(u + 1) * T, :], axis=0, keepdims=True)
                  for u in range(2 * B)]                                    # 2B x (1, E)

        # ---- decoder: content matmul + per-utterance speaker path (sublane bcast) ----
        dec = jnp.dot(jnp.tanh(mu), wdc_ref[...],
                      preferred_element_type=jnp.float32)                   # (BT, M)
        spk_rows = []
        for u in range(B):
            sd = jnp.dot(pooled[u], wds_ref[...],
                         preferred_element_type=jnp.float32)                # (1, M)
            spk_rows.append(jnp.broadcast_to(sd, (T, n_mels)))              # (T, M)
        dec = dec + jnp.concatenate(spk_rows, axis=0) + bdec_ref[...]       # offsets 8-aligned
        dec_ref[...] = dec

        # ---- losses (static REG gates resolved at trace time) ----
        loss = REG['rec'] * jnp.mean(jnp.abs(dec - x))                      # F.l1_loss
        if REG['kl'] > 0:
            loss = loss + REG['kl'] * (0.5 * jnp.mean(
                jnp.exp(log_sigma) + mu * mu - 1.0 - log_sigma))
        if REG['sia'] > 0:
            sia = 0.0
            for u in range(B):        # cosine_embedding_loss with target = +1
                e_u, er_u = pooled[u], pooled[B + u]
                d = jnp.sum(e_u * er_u)
                n1 = jnp.sum(e_u * e_u)
                n2 = jnp.sum(er_u * er_u)
                sia = sia + (1.0 - d * lax.rsqrt(jnp.maximum(n1 * n2, 1e-16)))
            loss = loss + REG['sia'] * (sia / B)
        # REG['mi'] == 0 -> MI branch skipped (see TODO at top of file).
        loss_ref[...] = jnp.broadcast_to(loss, (1, 1))

    ins = [frames_all, cos_m, sin_m, fb,
           core['w_mu'], core['b_mu'], core['w_ls'], core['b_ls'],
           core['w_spk'], core['b_spk'], core['w_dc'], core['w_ds'], core['b_dec']]
    full2 = lambda a: pl.BlockSpec(a.shape, lambda i: (0, 0))
    return pl.pallas_call(
        kernel,
        grid=(1,),
        in_specs=[full2(a) for a in ins],
        out_specs=(pl.BlockSpec((BT, n_mels), lambda i: (0, 0)),
                   pl.BlockSpec((1, 1), lambda i: (0, 0))),
        out_shape=(jax.ShapeDtypeStruct((BT, n_mels), jnp.float32),
                   jax.ShapeDtypeStruct((1, 1), jnp.float32)),
        compiler_params=pltpu.CompilerParams(dimension_semantics=("arbitrary",)),
    )(*ins)


# ----------------------------------------------------------------------------
# VC.forward (model_name == 'mainvc' path)
# ----------------------------------------------------------------------------
def vc_forward(params, audio, ref_audio, shuffle_key=None):
    # shuffle_key is unused: for this synthetic per-frame + mean-pooled
    # speaker encoder, time_shuffle provably does not change the pooled
    # embeddings (kept in the signature for interface fidelity).
    del shuffle_key
    cos_m, sin_m, fb = params['mel'][0]              # mel = self.make_mel(...)[0]
    n_fft, hop = MEL_CFG['n_fft'][0], MEL_CFG['hop_length'][0]
    n_mels = MEL_CFG['n_mels'][0]

    if MEL_CFG['preemph'] > 0:
        audio = preemphasis(audio, MEL_CFG['preemph'])
        ref_audio = preemphasis(ref_audio, MEL_CFG['preemph'])

    frames_a = frame_audio(audio, n_fft, hop)        # (B, T, n_fft)
    frames_r = frame_audio(ref_audio, n_fft, hop)
    B, T, _ = frames_a.shape
    frames_all = (jnp.concatenate([frames_a, frames_r], axis=0)
                  .reshape(2 * B * T, n_fft).astype(jnp.bfloat16))

    dec, loss = vc_fused_pallas(frames_all, cos_m, sin_m, fb, params['core'], B, T)

    pred = jnp.transpose(dec.reshape(B, T, n_mels), (0, 2, 1))   # (B, n_mels, T)
    return {'pred': pred, 'loss': loss[0, 0]}


# ----------------------------------------------------------------------------
if __name__ == "__main__":
    key = jax.random.PRNGKey(0)
    k_param, k_audio, k_ref, k_shuf = jax.random.split(key, 4)
    params = init_params(k_param)

    B, L = 2, 624   # -> 1 + L/hop = 40 STFT frames per utterance
    audio = 0.1 * jax.random.normal(k_audio, (B, L), jnp.float32)
    ref_audio = 0.1 * jax.random.normal(k_ref, (B, L), jnp.float32)

    out = jax.jit(vc_forward)(params, audio, ref_audio, k_shuf)
    out = jax.block_until_ready(out)

    assert out['pred'].shape == (B, MEL_CFG['n_mels'][0], 40)
    assert out['loss'].shape == ()
    assert bool(jnp.isfinite(out['loss']))
    print("KERNEL_OK")
</pallas_src>

<mosaic_0001>
module attributes {stable_mosaic.version = 11 : i64} {
  func.func @kernel(%arg0: i32, %arg1: memref<160x64xbf16, #tpu.memory_space<vmem>>, %arg2: memref<64x33xbf16, #tpu.memory_space<vmem>>, %arg3: memref<64x33xbf16, #tpu.memory_space<vmem>>, %arg4: memref<33x16xbf16, #tpu.memory_space<vmem>>, %arg5: memref<16x32xf32, #tpu.memory_space<vmem>>, %arg6: memref<1x32xf32, #tpu.memory_space<vmem>>, %arg7: memref<16x32xf32, #tpu.memory_space<vmem>>, %arg8: memref<1x32xf32, #tpu.memory_space<vmem>>, %arg9: memref<16x32xf32, #tpu.memory_space<vmem>>, %arg10: memref<1x32xf32, #tpu.memory_space<vmem>>, %arg11: memref<32x16xf32, #tpu.memory_space<vmem>>, %arg12: memref<32x16xf32, #tpu.memory_space<vmem>>, %arg13: memref<1x16xf32, #tpu.memory_space<vmem>>, %arg14: memref<80x16xf32, #tpu.memory_space<vmem>>, %arg15: memref<1x1xf32, #tpu.memory_space<vmem>>) attributes {dimension_semantics = [#tpu.dimension_semantics<arbitrary>], iteration_bounds = array<i64: 1>, scalar_prefetch = 0 : i64, scratch_operands = 0 : i64, tpu.core_type = #tpu.core_type<tc>, window_params = [{pipeline_mode = #tpu.pipeline_mode<synchronous>, transform_indices = @transform_0, window_bounds = array<i64: 160, 64>}, {pipeline_mode = #tpu.pipeline_mode<synchronous>, transform_indices = @transform_1, window_bounds = array<i64: 64, 33>}, {pipeline_mode = #tpu.pipeline_mode<synchronous>, transform_indices = @transform_2, window_bounds = array<i64: 64, 33>}, {pipeline_mode = #tpu.pipeline_mode<synchronous>, transform_indices = @transform_3, window_bounds = array<i64: 33, 16>}, {pipeline_mode = #tpu.pipeline_mode<synchronous>, transform_indices = @transform_4, window_bounds = array<i64: 16, 32>}, {pipeline_mode = #tpu.pipeline_mode<synchronous>, transform_indices = @transform_5, window_bounds = array<i64: 1, 32>}, {pipeline_mode = #tpu.pipeline_mode<synchronous>, transform_indices = @transform_6, window_bounds = array<i64: 16, 32>}, {pipeline_mode = #tpu.pipeline_mode<synchronous>, transform_indices = @transform_7, window_bounds = array<i64: 1, 32>}, {pipeline_mode = #tpu.pipeline_mode<synchronous>, transform_indices = @transform_8, window_bounds = array<i64: 16, 32>}, {pipeline_mode = #tpu.pipeline_mode<synchronous>, transform_indices = @transform_9, window_bounds = array<i64: 1, 32>}, {pipeline_mode = #tpu.pipeline_mode<synchronous>, transform_indices = @transform_10, window_bounds = array<i64: 32, 16>}, {pipeline_mode = #tpu.pipeline_mode<synchronous>, transform_indices = @transform_11, window_bounds = array<i64: 32, 16>}, {pipeline_mode = #tpu.pipeline_mode<synchronous>, transform_indices = @transform_12, window_bounds = array<i64: 1, 16>}, {pipeline_mode = #tpu.pipeline_mode<synchronous>, transform_indices = @transform_13, window_bounds = array<i64: 80, 16>}, {pipeline_mode = #tpu.pipeline_mode<synchronous>, transform_indices = @transform_14, window_bounds = array<i64: 1, 1>}]} {
    %c0 = arith.constant 0 : index
    %c0_0 = arith.constant 0 : index
    %0 = vector.load %arg1[%c0, %c0_0] : memref<160x64xbf16, #tpu.memory_space<vmem>>, vector<160x64xbf16>
    %c0_1 = arith.constant 0 : index
    %c0_2 = arith.constant 0 : index
    %1 = vector.load %arg2[%c0_1, %c0_2] : memref<64x33xbf16, #tpu.memory_space<vmem>>, vector<64x33xbf16>
    %cst = arith.constant dense<0.000000e+00> : vector<160x33xf32>
    %2 = tpu.matmul %0, %1, %cst {dimension_numbers = #tpu.dot_dimension_numbers<[1], [0], [0], [1], [0, 0, 1, 1], [], []>} : vector<160x64xbf16>, vector<64x33xbf16>, vector<160x33xf32> -> vector<160x33xf32>
    %c0_3 = arith.constant 0 : index
    %c0_4 = arith.constant 0 : index
    %3 = vector.load %arg3[%c0_3, %c0_4] : memref<64x33xbf16, #tpu.memory_space<vmem>>, vector<64x33xbf16>
    %cst_5 = arith.constant dense<0.000000e+00> : vector<160x33xf32>
    %4 = tpu.matmul %0, %3, %cst_5 {dimension_numbers = #tpu.dot_dimension_numbers<[1], [0], [0], [1], [0, 0, 1, 1], [], []>} : vector<160x64xbf16>, vector<64x33xbf16>, vector<160x33xf32> -> vector<160x33xf32>
    %5 = arith.mulf %2, %2 : vector<160x33xf32>
    %6 = arith.mulf %4, %4 : vector<160x33xf32>
    %7 = arith.addf %5, %6 : vector<160x33xf32>
    %cst_6 = arith.constant 9.99999996E-13 : f32
    %8 = vector.broadcast %cst_6 : f32 to vector<160x33xf32>
    %9 = arith.addf %7, %8 : vector<160x33xf32>
    %10 = math.sqrt %9 : vector<160x33xf32>
    %11 = arith.truncf %10 : vector<160x33xf32> to vector<160x33xbf16>
    %c0_7 = arith.constant 0 : index
    %c0_8 = arith.constant 0 : index
    %12 = vector.load %arg4[%c0_7, %c0_8] : memref<33x16xbf16, #tpu.memory_space<vmem>>, vector<33x16xbf16>
    %cst_9 = arith.constant dense<0.000000e+00> : vector<160x16xf32>
    %13 = tpu.matmul %11, %12, %cst_9 {dimension_numbers = #tpu.dot_dimension_numbers<[1], [0], [0], [1], [0, 0, 1, 1], [], []>} : vector<160x33xbf16>, vector<33x16xbf16>, vector<160x16xf32> -> vector<160x16xf32>
    %cst_10 = arith.constant 9.99999971E-10 : f32
    %14 = vector.broadcast %cst_10 : f32 to vector<160x16xf32>
    %15 = arith.addf %13, %14 : vector<160x16xf32>
    %16 = math.log %15 : vector<160x16xf32>
    %17 = vector.extract_strided_slice %16 {offsets = [0, 0], sizes = [80, 16], strides = [1, 1]} : vector<160x16xf32> to vector<80x16xf32>
    %c0_11 = arith.constant 0 : index
    %c0_12 = arith.constant 0 : index
    %18 = vector.load %arg5[%c0_11, %c0_12] : memref<16x32xf32, #tpu.memory_space<vmem>>, vector<16x32xf32>
    %cst_13 = arith.constant dense<0.000000e+00> : vector<80x32xf32>
    %19 = tpu.matmul %17, %18, %cst_13 {dimension_numbers = #tpu.dot_dimension_numbers<[1], [0], [0], [1], [0, 0, 1, 1], [], []>} : vector<80x16xf32>, vector<16x32xf32>, vector<80x32xf32> -> vector<80x32xf32>
    %c0_14 = arith.constant 0 : index
    %c0_15 = arith.constant 0 : index
    %20 = vector.load %arg6[%c0_14, %c0_15] : memref<1x32xf32, #tpu.memory_space<vmem>>, vector<1x32xf32>
    %21 = vector.broadcast %20 : vector<1x32xf32> to vector<80x32xf32>
    %22 = arith.addf %19, %21 : vector<80x32xf32>
    %c0_16 = arith.constant 0 : index
    %c0_17 = arith.constant 0 : index
    %23 = vector.load %arg7[%c0_16, %c0_17] : memref<16x32xf32, #tpu.memory_space<vmem>>, vector<16x32xf32>
    %cst_18 = arith.constant dense<0.000000e+00> : vector<80x32xf32>
    %24 = tpu.matmul %17, %23, %cst_18 {dimension_numbers = #tpu.dot_dimension_numbers<[1], [0], [0], [1], [0, 0, 1, 1], [], []>} : vector<80x16xf32>, vector<16x32xf32>, vector<80x32xf32> -> vector<80x32xf32>
    %c0_19 = arith.constant 0 : index
    %c0_20 = arith.constant 0 : index
    %25 = vector.load %arg8[%c0_19, %c0_20] : memref<1x32xf32, #tpu.memory_space<vmem>>, vector<1x32xf32>
    %26 = vector.broadcast %25 : vector<1x32xf32> to vector<80x32xf32>
    %27 = arith.addf %24, %26 : vector<80x32xf32>
    %c0_21 = arith.constant 0 : index
    %c0_22 = arith.constant 0 : index
    %28 = vector.load %arg9[%c0_21, %c0_22] : memref<16x32xf32, #tpu.memory_space<vmem>>, vector<16x32xf32>
    %cst_23 = arith.constant dense<0.000000e+00> : vector<160x32xf32>
    %29 = tpu.matmul %16, %28, %cst_23 {dimension_numbers = #tpu.dot_dimension_numbers<[1], [0], [0], [1], [0, 0, 1, 1], [], []>} : vector<160x16xf32>, vector<16x32xf32>, vector<160x32xf32> -> vector<160x32xf32>
    %c0_24 = arith.constant 0 : index
    %c0_25 = arith.constant 0 : index
    %30 = vector.load %arg10[%c0_24, %c0_25] : memref<1x32xf32, #tpu.memory_space<vmem>>, vector<1x32xf32>
    %31 = vector.broadcast %30 : vector<1x32xf32> to vector<160x32xf32>
    %32 = arith.addf %29, %31 : vector<160x32xf32>
    %33 = math.tanh %32 : vector<160x32xf32>
    %34 = vector.extract_strided_slice %33 {offsets = [0, 0], sizes = [40, 32], strides = [1, 1]} : vector<160x32xf32> to vector<40x32xf32>
    %cst_26 = arith.constant dense<0.000000e+00> : vector<32xf32>
    %35 = vector.multi_reduction <add>, %34, %cst_26 [0] : vector<40x32xf32> to vector<32xf32>
    %36 = vector.shape_cast %35 : vector<32xf32> to vector<1x32xf32>
    %cst_27 = arith.constant 4.000000e+01 : f32
    %37 = vector.broadcast %cst_27 : f32 to vector<1x32xf32>
    %38 = arith.divf %36, %37 : vector<1x32xf32>
    %39 = vector.extract_strided_slice %33 {offsets = [40, 0], sizes = [40, 32], strides = [1, 1]} : vector<160x32xf32> to vector<40x32xf32>
    %cst_28 = arith.constant dense<0.000000e+00> : vector<32xf32>
    %40 = vector.multi_reduction <add>, %39, %cst_28 [0] : vector<40x32xf32> to vector<32xf32>
    %41 = vector.shape_cast %40 : vector<32xf32> to vector<1x32xf32>
    %cst_29 = arith.constant 4.000000e+01 : f32
    %42 = vector.broadcast %cst_29 : f32 to vector<1x32xf32>
    %43 = arith.divf %41, %42 : vector<1x32xf32>
    %44 = vector.extract_strided_slice %33 {offsets = [80, 0], sizes = [40, 32], strides = [1, 1]} : vector<160x32xf32> to vector<40x32xf32>
    %cst_30 = arith.constant dense<0.000000e+00> : vector<32xf32>
    %45 = vector.multi_reduction <add>, %44, %cst_30 [0] : vector<40x32xf32> to vector<32xf32>
    %46 = vector.shape_cast %45 : vector<32xf32> to vector<1x32xf32>
    %cst_31 = arith.constant 4.000000e+01 : f32
    %47 = vector.broadcast %cst_31 : f32 to vector<1x32xf32>
    %48 = arith.divf %46, %47 : vector<1x32xf32>
    %49 = vector.extract_strided_slice %33 {offsets = [120, 0], sizes = [40, 32], strides = [1, 1]} : vector<160x32xf32> to vector<40x32xf32>
    %cst_32 = arith.constant dense<0.000000e+00> : vector<32xf32>
    %50 = vector.multi_reduction <add>, %49, %cst_32 [0] : vector<40x32xf32> to vector<32xf32>
    %51 = vector.shape_cast %50 : vector<32xf32> to vector<1x32xf32>
    %cst_33 = arith.constant 4.000000e+01 : f32
    %52 = vector.broadcast %cst_33 : f32 to vector<1x32xf32>
    %53 = arith.divf %51, %52 : vector<1x32xf32>
    %54 = math.tanh %22 : vector<80x32xf32>
    %c0_34 = arith.constant 0 : index
    %c0_35 = arith.constant 0 : index
    %55 = vector.load %arg11[%c0_34, %c0_35] : memref<32x16xf32, #tpu.memory_space<vmem>>, vector<32x16xf32>
    %cst_36 = arith.constant dense<0.000000e+00> : vector<80x16xf32>
    %56 = tpu.matmul %54, %55, %cst_36 {dimension_numbers = #tpu.dot_dimension_numbers<[1], [0], [0], [1], [0, 0, 1, 1], [], []>} : vector<80x32xf32>, vector<32x16xf32>, vector<80x16xf32> -> vector<80x16xf32>
    %c0_37 = arith.constant 0 : index
    %c0_38 = arith.constant 0 : index
    %57 = vector.load %arg12[%c0_37, %c0_38] : memref<32x16xf32, #tpu.memory_space<vmem>>, vector<32x16xf32>
    %cst_39 = arith.constant dense<0.000000e+00> : vector<1x16xf32>
    %58 = tpu.matmul %38, %57, %cst_39 {dimension_numbers = #tpu.dot_dimension_numbers<[1], [0], [0], [1], [0, 0, 1, 1], [], []>} : vector<1x32xf32>, vector<32x16xf32>, vector<1x16xf32> -> vector<1x16xf32>
    %59 = vector.shape_cast %58 : vector<1x16xf32> to vector<1x16xf32>
    %60 = vector.broadcast %59 : vector<1x16xf32> to vector<40x16xf32>
    %c0_40 = arith.constant 0 : index
    %c0_41 = arith.constant 0 : index
    %61 = vector.load %arg12[%c0_40, %c0_41] : memref<32x16xf32, #tpu.memory_space<vmem>>, vector<32x16xf32>
    %cst_42 = arith.constant dense<0.000000e+00> : vector<1x16xf32>
    %62 = tpu.matmul %43, %61, %cst_42 {dimension_numbers = #tpu.dot_dimension_numbers<[1], [0], [0], [1], [0, 0, 1, 1], [], []>} : vector<1x32xf32>, vector<32x16xf32>, vector<1x16xf32> -> vector<1x16xf32>
    %63 = vector.shape_cast %62 : vector<1x16xf32> to vector<1x16xf32>
    %64 = vector.broadcast %63 : vector<1x16xf32> to vector<40x16xf32>
    %65 = tpu.concatenate %60, %64 in 0 : vector<40x16xf32>, vector<40x16xf32> -> vector<80x16xf32>
    %66 = arith.addf %56, %65 : vector<80x16xf32>
    %c0_43 = arith.constant 0 : index
    %c0_44 = arith.constant 0 : index
    %67 = vector.load %arg13[%c0_43, %c0_44] : memref<1x16xf32, #tpu.memory_space<vmem>>, vector<1x16xf32>
    %68 = vector.broadcast %67 : vector<1x16xf32> to vector<80x16xf32>
    %69 = arith.addf %66, %68 : vector<80x16xf32>
    %c0_45 = arith.constant 0 : index
    %c0_46 = arith.constant 0 : index
    %70 = vector.load %arg14[%c0_45, %c0_46] : memref<80x16xf32, #tpu.memory_space<vmem>>, vector<80x16xf32>
    tpu.vector_store %arg14[%c0_45, %c0_46], %69 {strides = array<i32>} : memref<80x16xf32, #tpu.memory_space<vmem>>, vector<80x16xf32>,
    %71 = arith.subf %69, %17 : vector<80x16xf32>
    %72 = math.absf %71 : vector<80x16xf32>
    %73 = vector.shape_cast %72 : vector<80x16xf32> to vector<1x80x16xf32>
    %cst_47 = arith.constant dense<0.000000e+00> : vector<1xf32>
    %74 = vector.multi_reduction <add>, %73, %cst_47 [1, 2] : vector<1x80x16xf32> to vector<1xf32>
    %75 = vector.shape_cast %74 : vector<1xf32> to vector<1x1x1xf32>
    %76 = vector.extract %75[0, 0, 0] : f32 from vector<1x1x1xf32>
    %cst_48 = arith.constant 1.280000e+03 : f32
    %77 = arith.divf %76, %cst_48 : f32
    %cst_49 = arith.constant 1.000000e+01 : f32
    %78 = arith.mulf %cst_49, %77 : f32
    %79 = math.exp %27 : vector<80x32xf32>
    %80 = arith.mulf %22, %22 : vector<80x32xf32>
    %81 = arith.addf %79, %80 : vector<80x32xf32>
    %cst_50 = arith.constant 1.000000e+00 : f32
    %82 = vector.broadcast %cst_50 : f32 to vector<80x32xf32>
    %83 = arith.subf %81, %82 : vector<80x32xf32>
    %84 = arith.subf %83, %27 : vector<80x32xf32>
    %85 = vector.shape_cast %84 : vector<80x32xf32> to vector<1x80x32xf32>
    %cst_51 = arith.constant dense<0.000000e+00> : vector<1xf32>
    %86 = vector.multi_reduction <add>, %85, %cst_51 [1, 2] : vector<1x80x32xf32> to vector<1xf32>
    %87 = vector.shape_cast %86 : vector<1xf32> to vector<1x1x1xf32>
    %88 = vector.extract %87[0, 0, 0] : f32 from vector<1x1x1xf32>
    %cst_52 = arith.constant 2.560000e+03 : f32
    %89 = arith.divf %88, %cst_52 : f32
    %cst_53 = arith.constant 5.000000e-01 : f32
    %90 = arith.mulf %cst_53, %89 : f32
    %cst_54 = arith.constant 1.000000e+00 : f32
    %91 = arith.mulf %cst_54, %90 : f32
    %92 = arith.addf %78, %91 : f32
    %93 = arith.mulf %38, %48 : vector<1x32xf32>
    %94 = vector.shape_cast %93 : vector<1x32xf32> to vector<1x1x32xf32>
    %cst_55 = arith.constant dense<0.000000e+00> : vector<1xf32>
    %95 = vector.multi_reduction <add>, %94, %cst_55 [1, 2] : vector<1x1x32xf32> to vector<1xf32>
    %96 = vector.shape_cast %95 : vector<1xf32> to vector<1x1x1xf32>
    %97 = vector.extract %96[0, 0, 0] : f32 from vector<1x1x1xf32>
    %98 = arith.mulf %38, %38 : vector<1x32xf32>
    %99 = vector.shape_cast %98 : vector<1x32xf32> to vector<1x1x32xf32>
    %cst_56 = arith.constant dense<0.000000e+00> : vector<1xf32>
    %100 = vector.multi_reduction <add>, %99, %cst_56 [1, 2] : vector<1x1x32xf32> to vector<1xf32>
    %101 = vector.shape_cast %100 : vector<1xf32> to vector<1x1x1xf32>
    %102 = vector.extract %101[0, 0, 0] : f32 from vector<1x1x1xf32>
    %103 = arith.mulf %48, %48 : vector<1x32xf32>
    %104 = vector.shape_cast %103 : vector<1x32xf32> to vector<1x1x32xf32>
    %cst_57 = arith.constant dense<0.000000e+00> : vector<1xf32>
    %105 = vector.multi_reduction <add>, %104, %cst_57 [1, 2] : vector<1x1x32xf32> to vector<1xf32>
    %106 = vector.shape_cast %105 : vector<1xf32> to vector<1x1x1xf32>
    %107 = vector.extract %106[0, 0, 0] : f32 from vector<1x1x1xf32>
    %108 = arith.mulf %102, %107 : f32
    %cst_58 = arith.constant 1.000000e-16 : f32
    %109 = arith.maximumf %108, %cst_58 : f32
    %110 = math.rsqrt %109 : f32
    %111 = arith.mulf %97, %110 : f32
    %cst_59 = arith.constant 1.000000e+00 : f32
    %112 = arith.subf %cst_59, %111 : f32
    %cst_60 = arith.constant 0.000000e+00 : f32
    %113 = arith.addf %cst_60, %112 : f32
    %114 = arith.mulf %43, %53 : vector<1x32xf32>
    %115 = vector.shape_cast %114 : vector<1x32xf32> to vector<1x1x32xf32>
    %cst_61 = arith.constant dense<0.000000e+00> : vector<1xf32>
    %116 = vector.multi_reduction <add>, %115, %cst_61 [1, 2] : vector<1x1x32xf32> to vector<1xf32>
    %117 = vector.shape_cast %116 : vector<1xf32> to vector<1x1x1xf32>
    %118 = vector.extract %117[0, 0, 0] : f32 from vector<1x1x1xf32>
    %119 = arith.mulf %43, %43 : vector<1x32xf32>
    %120 = vector.shape_cast %119 : vector<1x32xf32> to vector<1x1x32xf32>
    %cst_62 = arith.constant dense<0.000000e+00> : vector<1xf32>
    %121 = vector.multi_reduction <add>, %120, %cst_62 [1, 2] : vector<1x1x32xf32> to vector<1xf32>
    %122 = vector.shape_cast %121 : vector<1xf32> to vector<1x1x1xf32>
    %123 = vector.extract %122[0, 0, 0] : f32 from vector<1x1x1xf32>
    %124 = arith.mulf %53, %53 : vector<1x32xf32>
    %125 = vector.shape_cast %124 : vector<1x32xf32> to vector<1x1x32xf32>
    %cst_63 = arith.constant dense<0.000000e+00> : vector<1xf32>
    %126 = vector.multi_reduction <add>, %125, %cst_63 [1, 2] : vector<1x1x32xf32> to vector<1xf32>
    %127 = vector.shape_cast %126 : vector<1xf32> to vector<1x1x1xf32>
    %128 = vector.extract %127[0, 0, 0] : f32 from vector<1x1x1xf32>
    %129 = arith.mulf %123, %128 : f32
    %cst_64 = arith.constant 1.000000e-16 : f32
    %130 = arith.maximumf %129, %cst_64 : f32
    %131 = math.rsqrt %130 : f32
    %132 = arith.mulf %118, %131 : f32
    %cst_65 = arith.constant 1.000000e+00 : f32
    %133 = arith.subf %cst_65, %132 : f32
    %134 = arith.addf %113, %133 : f32
    %cst_66 = arith.constant 2.000000e+00 : f32
    %135 = arith.divf %134, %cst_66 : f32
    %cst_67 = arith.constant 1.000000e+00 : f32
    %136 = arith.mulf %cst_67, %135 : f32
    %137 = arith.addf %92, %136 : f32
    %138 = vector.broadcast %137 : f32 to vector<1x1xf32>
    %c0_68 = arith.constant 0 : index
    %c0_69 = arith.constant 0 : index
    %139 = vector.load %arg15[%c0_68, %c0_69] : memref<1x1xf32, #tpu.memory_space<vmem>>, vector<1x1xf32>
    tpu.vector_store %arg15[%c0_68, %c0_69], %138 {strides = array<i32>} : memref<1x1xf32, #tpu.memory_space<vmem>>, vector<1x1xf32>,
    return
  }
  func.func @transform_0(%arg0: i32) -> (i32, i32) {
    %c0_i32 = arith.constant 0 : i32
    %c0_i32_0 = arith.constant 0 : i32
    %c0_i32_1 = arith.constant 0 : i32
    return %c0_i32, %c0_i32_0 : i32, i32
  }
  func.func @transform_1(%arg0: i32) -> (i32, i32) {
    %c0_i32 = arith.constant 0 : i32
    %c0_i32_0 = arith.constant 0 : i32
    %c0_i32_1 = arith.constant 0 : i32
    return %c0_i32, %c0_i32_0 : i32, i32
  }
  func.func @transform_2(%arg0: i32) -> (i32, i32) {
    %c0_i32 = arith.constant 0 : i32
    %c0_i32_0 = arith.constant 0 : i32
    %c0_i32_1 = arith.constant 0 : i32
    return %c0_i32, %c0_i32_0 : i32, i32
  }
  func.func @transform_3(%arg0: i32) -> (i32, i32) {
    %c0_i32 = arith.constant 0 : i32
    %c0_i32_0 = arith.constant 0 : i32
    %c0_i32_1 = arith.constant 0 : i32
    return %c0_i32, %c0_i32_0 : i32, i32
  }
  func.func @transform_4(%arg0: i32) -> (i32, i32) {
    %c0_i32 = arith.constant 0 : i32
    %c0_i32_0 = arith.constant 0 : i32
    %c0_i32_1 = arith.constant 0 : i32
    return %c0_i32, %c0_i32_0 : i32, i32
  }
  func.func @transform_5(%arg0: i32) -> (i32, i32) {
    %c0_i32 = arith.constant 0 : i32
    %c0_i32_0 = arith.constant 0 : i32
    %c0_i32_1 = arith.constant 0 : i32
    return %c0_i32, %c0_i32_0 : i32, i32
  }
  func.func @transform_6(%arg0: i32) -> (i32, i32) {
    %c0_i32 = arith.constant 0 : i32
    %c0_i32_0 = arith.constant 0 : i32
    %c0_i32_1 = arith.constant 0 : i32
    return %c0_i32, %c0_i32_0 : i32, i32
  }
  func.func @transform_7(%arg0: i32) -> (i32, i32) {
    %c0_i32 = arith.constant 0 : i32
    %c0_i32_0 = arith.constant 0 : i32
    %c0_i32_1 = arith.constant 0 : i32
    return %c0_i32, %c0_i32_0 : i32, i32
  }
  func.func @transform_8(%arg0: i32) -> (i32, i32) {
    %c0_i32 = arith.constant 0 : i32
    %c0_i32_0 = arith.constant 0 : i32
    %c0_i32_1 = arith.constant 0 : i32
    return %c0_i32, %c0_i32_0 : i32, i32
  }
  func.func @transform_9(%arg0: i32) -> (i32, i32) {
    %c0_i32 = arith.constant 0 : i32
    %c0_i32_0 = arith.constant 0 : i32
    %c0_i32_1 = arith.constant 0 : i32
    return %c0_i32, %c0_i32_0 : i32, i32
  }
  func.func @transform_10(%arg0: i32) -> (i32, i32) {
    %c0_i32 = arith.constant 0 : i32
    %c0_i32_0 = arith.constant 0 : i32
    %c0_i32_1 = arith.constant 0 : i32
    return %c0_i32, %c0_i32_0 : i32, i32
  }
  func.func @transform_11(%arg0: i32) -> (i32, i32) {
    %c0_i32 = arith.constant 0 : i32
    %c0_i32_0 = arith.constant 0 : i32
    %c0_i32_1 = arith.constant 0 : i32
    return %c0_i32, %c0_i32_0 : i32, i32
  }
  func.func @transform_12(%arg0: i32) -> (i32, i32) {
    %c0_i32 = arith.constant 0 : i32
    %c0_i32_0 = arith.constant 0 : i32
    %c0_i32_1 = arith.constant 0 : i32
    return %c0_i32, %c0_i32_0 : i32, i32
  }
  func.func @transform_13(%arg0: i32) -> (i32, i32) {
    %c0_i32 = arith.constant 0 : i32
    %c0_i32_0 = arith.constant 0 : i32
    %c0_i32_1 = arith.constant 0 : i32
    return %c0_i32, %c0_i32_0 : i32, i32
  }
  func.func @transform_14(%arg0: i32) -> (i32, i32) {
    %c0_i32 = arith.constant 0 : i32
    %c0_i32_0 = arith.constant 0 : i32
    %c0_i32_1 = arith.constant 0 : i32
    return %c0_i32, %c0_i32_0 : i32, i32
  }
}

</mosaic_0001>

<llo_original>
// kernel: vc_forward.1
$region0: #{vc_forward.1}
  #allocation0 [shape = 'u32[]', space=smem, size = 0x4, offset = 0x4, fixed_abs, tag = 'smem constant byte address 0x4 - core index']
  #allocation1 [shape = 'u32[72,128]{1,0:T(1,128)}', space=vmem, size = 0x9000, scoped, tag = 'internal scratch']
  %s0 = inlined_call_operand.vmem [shape: bf16[160,64], index: 0, kind: input, shape index: {}]
  %s1 = inlined_call_operand.vmem [shape: bf16[64,33], index: 1, kind: input, shape index: {}]
  %s2 = inlined_call_operand.vmem [shape: bf16[64,33], index: 2, kind: input, shape index: {}]
  %s3 = inlined_call_operand.vmem [shape: bf16[33,16], index: 3, kind: input, shape index: {}]
  %s4 = inlined_call_operand.vmem [shape: f32[16,32], index: 4, kind: input, shape index: {}]
  %s5 = inlined_call_operand.vmem [shape: f32[1,32], index: 5, kind: input, shape index: {}]
  %s6 = inlined_call_operand.vmem [shape: f32[16,32], index: 6, kind: input, shape index: {}]
  %s7 = inlined_call_operand.vmem [shape: f32[1,32], index: 7, kind: input, shape index: {}]
  %s8 = inlined_call_operand.vmem [shape: f32[16,32], index: 8, kind: input, shape index: {}]
  %s9 = inlined_call_operand.vmem [shape: f32[1,32], index: 9, kind: input, shape index: {}]
  %s10 = inlined_call_operand.vmem [shape: f32[32,16], index: 10, kind: input, shape index: {}]
  %s11 = inlined_call_operand.vmem [shape: f32[32,16], index: 11, kind: input, shape index: {}]
  %s12 = inlined_call_operand.vmem [shape: f32[1,16], index: 12, kind: input, shape index: {}]
  %s13 = inlined_call_operand.vmem [shape: f32[80,16], index: 13, kind: output, shape index: {0}]
  %s14 = inlined_call_operand.hbm [shape: f32[1,1], index: 14, kind: output, shape index: {1}]
  %15 = xla_tuple %s13, %s14
  %s16 = sld [smem:[#allocation0]]
  $region70: #{vc_forward.1} parent=0
    _
  %s18 = ssub.s32 1, %s16
  %s19 = scalar_select 0, %s18, %s16
  $region1: #{vc_forward.1} parent=0
    #allocation2 [shape = 'u8[512]{0}', space=vmem, size = 0x400, scoped, tag = 'output window, operand 1, single buffered']
    #allocation3 [shape = 's32[1]{0}', space=sflag, size = 0x4, scoped, tag = 'scoped memory for vc_forward.1']
    %20 = vsyncpa [#allocation3], 0
    // Predicated region
    $region2: #{vc_forward.1} parent=1 // pred_check
      _
    $region3: #{vc_forward.1} parent=1 // pred_check_branch
      %22 = sbr.rel (0) target = $region5
    $region4: #{vc_forward.1} parent=1 // pred_region
      _
    $region5: #{vc_forward.1} parent=1 // pred_fallthru
      _
    // Predicated region
    $region6: #{vc_forward.1} parent=1 // pred_check
      _
    $region7: #{vc_forward.1} parent=1 // pred_check_branch
      %24 = sbr.rel (0) target = $region9
    $region8: #{vc_forward.1} parent=1 // pred_region
      _
    $region9: #{vc_forward.1} parent=1 // pred_fallthru
      _
    // Predicated region
    $region10: #{vc_forward.1} parent=1 // pred_check
      _
    $region11: #{vc_forward.1} parent=1 // pred_check_branch
      %26 = sbr.rel (0) target = $region13
    $region12: #{vc_forward.1} parent=1 // pred_region
      _
    $region13: #{vc_forward.1} parent=1 // pred_fallthru
      _
    // Predicated region
    $region14: #{vc_forward.1} parent=1 // pred_check
      _
    $region15: #{vc_forward.1} parent=1 // pred_check_branch
      %28 = sbr.rel (0) target = $region17
    $region16: #{vc_forward.1} parent=1 // pred_region
      _
    $region17: #{vc_forward.1} parent=1 // pred_fallthru
      _
    // Predicated region
    $region18: #{vc_forward.1} parent=1 // pred_check
      _
    $region19: #{vc_forward.1} parent=1 // pred_check_branch
      %30 = sbr.rel (0) target = $region21
    $region20: #{vc_forward.1} parent=1 // pred_region
      _
    $region21: #{vc_forward.1} parent=1 // pred_fallthru
      _
    // Predicated region
    $region22: #{vc_forward.1} parent=1 // pred_check
      _
    $region23: #{vc_forward.1} parent=1 // pred_check_branch
      %32 = sbr.rel (0) target = $region25
    $region24: #{vc_forward.1} parent=1 // pred_region
      _
    $region25: #{vc_forward.1} parent=1 // pred_fallthru
      _
    // Predicated region
    $region26: #{vc_forward.1} parent=1 // pred_check
      _
    $region27: #{vc_forward.1} parent=1 // pred_check_branch
      %34 = sbr.rel (0) target = $region29
    $region28: #{vc_forward.1} parent=1 // pred_region
      _
    $region29: #{vc_forward.1} parent=1 // pred_fallthru
      _
    // Predicated region
    $region30: #{vc_forward.1} parent=1 // pred_check
      _
    $region31: #{vc_forward.1} parent=1 // pred_check_branch
      %36 = sbr.rel (0) target = $region33
    $region32: #{vc_forward.1} parent=1 // pred_region
      _
    $region33: #{vc_forward.1} parent=1 // pred_fallthru
      _
    // Predicated region
    $region34: #{vc_forward.1} parent=1 // pred_check
      _
    $region35: #{vc_forward.1} parent=1 // pred_check_branch
      %38 = sbr.rel (0) target = $region37
    $region36: #{vc_forward.1} parent=1 // pred_region
      _
    $region37: #{vc_forward.1} parent=1 // pred_fallthru
      _
    // Predicated region
    $region38: #{vc_forward.1} parent=1 // pred_check
      _
    $region39: #{vc_forward.1} parent=1 // pred_check_branch
      %40 = sbr.rel (0) target = $region41
    $region40: #{vc_forward.1} parent=1 // pred_region
      _
    $region41: #{vc_forward.1} parent=1 // pred_fallthru
      _
    // Predicated region
    $region42: #{vc_forward.1} parent=1 // pred_check
      _
    $region43: #{vc_forward.1} parent=1 // pred_check_branch
      %42 = sbr.rel (0) target = $region45
    $region44: #{vc_forward.1} parent=1 // pred_region
      _
    $region45: #{vc_forward.1} parent=1 // pred_fallthru
      _
    // Predicated region
    $region46: #{vc_forward.1} parent=1 // pred_check
      _
    $region47: #{vc_forward.1} parent=1 // pred_check_branch
      %44 = sbr.rel (0) target = $region49
    $region48: #{vc_forward.1} parent=1 // pred_region
      _
    $region49: #{vc_forward.1} parent=1 // pred_fallthru
      _
    // Predicated region
    $region50: #{vc_forward.1} parent=1 // pred_check
      _
    $region51: #{vc_forward.1} parent=1 // pred_check_branch
      %46 = sbr.rel (0) target = $region53
    $region52: #{vc_forward.1} parent=1 // pred_region
      _
    $region53: #{vc_forward.1} parent=1 // pred_fallthru
      _
    %v48 = vld [vmem:[%s0] sm:$0xf]
    %v49 = vld [vmem:[%s0 + $0x4] sm:$0xf]
    %v50 = vld [vmem:[%s0 + $0x8] sm:$0xf]
    %v51 = vld [vmem:[%s0 + $0xc] sm:$0xf]
    %v52 = vld [vmem:[%s0 + $0x10] sm:$0xf]
    %v53 = vld [vmem:[%s0 + $0x14] sm:$0xf]
    %v54 = vld [vmem:[%s0 + $0x18] sm:$0xf]
    %v55 = vld [vmem:[%s0 + $0x1c] sm:$0xf]
    %v56 = vld [vmem:[%s0 + $0x20] sm:$0xf]
    %v57 = vld [vmem:[%s0 + $0x24] sm:$0xf]
    %v58 = vld [vmem:[%s0 + $0x28] sm:$0xf]
    %v59 = vld [vmem:[%s0 + $0x2c] sm:$0xf]
    %v60 = vld [vmem:[%s0 + $0x30] sm:$0xf]
    %v61 = vld [vmem:[%s0 + $0x34] sm:$0xf]
    %v62 = vld [vmem:[%s0 + $0x38] sm:$0xf]
    %v63 = vld [vmem:[%s0 + $0x3c] sm:$0xf]
    %v64 = vld [vmem:[%s0 + $0x40] sm:$0xf]
    %v65 = vld [vmem:[%s0 + $0x44] sm:$0xf]
    %v66 = vld [vmem:[%s0 + $0x48] sm:$0xf]
    %v67 = vld [vmem:[%s0 + $0x4c] sm:$0xf]
    %v68 = vld [vmem:[%s1] sm:$0xf]
    %v69 = vld [vmem:[%s1 + $0x4] sm:$0xf]
    %v70 = vld [vmem:[%s1 + $0x8] sm:$0xf]
    %v71 = vld [vmem:[%s1 + $0xc] sm:$0xf]
    %v72 = vld [vmem:[%s1 + $0x10] sm:$0xf]
    %v73 = vld [vmem:[%s1 + $0x14] sm:$0xf]
    %v74 = vld [vmem:[%s1 + $0x18] sm:$0xf]
    %v75 = vld [vmem:[%s1 + $0x1c] sm:$0xf]
    %v96 = vunpack.c.l.b16 %v48
    %v97 = vunpack.c.l.b16 %v49
    %v98 = vunpack.c.l.b16 %v50
    %v99 = vunpack.c.l.b16 %v51
    %v100 = vunpack.c.l.b16 %v52
    %v101 = vunpack.c.l.b16 %v53
    %v102 = vunpack.c.l.b16 %v54
    %v103 = vunpack.c.l.b16 %v55
    %v104 = vunpack.c.l.b16 %v56
    %v105 = vunpack.c.l.b16 %v57
    %v106 = vunpack.c.l.b16 %v58
    %v107 = vunpack.c.l.b16 %v59
    %v108 = vunpack.c.l.b16 %v60
    %v109 = vunpack.c.l.b16 %v61
    %v110 = vunpack.c.l.b16 %v62
    %v111 = vunpack.c.l.b16 %v63
    %v112 = vunpack.c.l.b16 %v64
    %v113 = vunpack.c.l.b16 %v65
    %v114 = vunpack.c.l.b16 %v66
    %v115 = vunpack.c.l.b16 %v67
    %v116 = vpack.c.b16 %v97, %v96
    %v117 = vpack.c.b16 %v99, %v98
    %v118 = vpack.c.b16 %v101, %v100
    %v119 = vpack.c.b16 %v103, %v102
    %v120 = vpack.c.b16 %v105, %v104
    %v121 = vpack.c.b16 %v107, %v106
    %v122 = vpack.c.b16 %v109, %v108
    %v123 = vpack.c.b16 %v111, %v110
    %v124 = vpack.c.b16 %v113, %v112
    %v125 = vpack.c.b16 %v115, %v114
    %v134 = vunpack.c.l.b16 %v68
    %v135 = vunpack.c.l.b16 %v69
    %v136 = vunpack.c.l.b16 %v70
    %v137 = vunpack.c.l.b16 %v71
    %v138 = vunpack.c.l.b16 %v72
    %v139 = vunpack.c.l.b16 %v73
    %v140 = vunpack.c.l.b16 %v74
    %v141 = vunpack.c.l.b16 %v75
    %v142 = vpack.c.b16 %v135, %v134
    %v143 = vpack.c.b16 %v137, %v136
    %v144 = vpack.c.b16 %v139, %v138
    %v145 = vpack.c.b16 %v141, %v140
    %vm150 = vcmask 523264
    %v152 = vsel %vm150, %v116, 0
    %v155 = vsel %vm150, %v117, 0
    %v158 = vsel %vm150, %v118, 0
    %v161 = vsel %vm150, %v119, 0
    %v164 = vsel %vm150, %v120, 0
    %v167 = vsel %vm150, %v121, 0
    %v170 = vsel %vm150, %v122, 0
    %v173 = vsel %vm150, %v123, 0
    %v176 = vsel %vm150, %v124, 0
    %v179 = vsel %vm150, %v125, 0
    %181 = vmatpush.bf16.msra.mxu0 0
    %182 = vmatpush.bf16.msra.mxu0 0
    %183 = vmatpush.bf16.msra.mxu0 0
    %184 = vmatpush.bf16.msra.mxu0 0
    %185 = vmatpush.bf16.msra.mxu0 %v145
    %186 = vmatpush.bf16.msra.mxu0 %v144
    %187 = vmatpush.bf16.msra.mxu0 %v143
    %188 = vmatpush.bf16.msra.mxu0 %v142
    %189 = vmatmul.bf16.gmra.mxu0 %v152
    %v190 = vpop.f32.mrf.mxu0
    %v191 = vadd.f32 0.0, %v190
    %v192 = vpop.f32.mrf.mxu0
    %v193 = vadd.f32 0.0, %v192
    %194 = vmatmul.bf16.gmra.mxu0 %v155
    %v195 = vpop.f32.mrf.mxu0
    %v196 = vadd.f32 0.0, %v195
    %v197 = vpop.f32.mrf.mxu0
    %v198 = vadd.f32 0.0, %v197
    %199 = vmatmul.bf16.gmra.mxu0 %v158
    %v200 = vpop.f32.mrf.mxu0
    %v201 = vadd.f32 0.0, %v200
    %v202 = vpop.f32.mrf.mxu0
    %v203 = vadd.f32 0.0, %v202
    %204 = vmatmul.bf16.gmra.mxu0 %v161
    %v205 = vpop.f32.mrf.mxu0
    %v206 = vadd.f32 0.0, %v205
    %v207 = vpop.f32.mrf.mxu0
    %v208 = vadd.f32 0.0, %v207
    %209 = vmatmul.bf16.gmra.mxu0 %v164
    %v210 = vpop.f32.mrf.mxu0
    %v211 = vadd.f32 0.0, %v210
    %v212 = vpop.f32.mrf.mxu0
    %v213 = vadd.f32 0.0, %v212
    %214 = vmatmul.bf16.gmra.mxu0 %v167
    %v215 = vpop.f32.mrf.mxu0
    %v216 = vadd.f32 0.0, %v215
    %v217 = vpop.f32.mrf.mxu0
    %v218 = vadd.f32 0.0, %v217
    %219 = vmatmul.bf16.gmra.mxu0 %v170
    %v220 = vpop.f32.mrf.mxu0
    %v221 = vadd.f32 0.0, %v220
    %v222 = vpop.f32.mrf.mxu0
    %v223 = vadd.f32 0.0, %v222
    %224 = vmatmul.bf16.gmra.mxu0 %v173
    %v225 = vpop.f32.mrf.mxu0
    %v226 = vadd.f32 0.0, %v225
    %v227 = vpop.f32.mrf.mxu0
    %v228 = vadd.f32 0.0, %v227
    %229 = vmatmul.bf16.gmra.mxu0 %v176
    %v230 = vpop.f32.mrf.mxu0
    %v231 = vadd.f32 0.0, %v230
    %v232 = vpop.f32.mrf.mxu0
    %v233 = vadd.f32 0.0, %v232
    %234 = vmatmul.bf16.gmra.mxu0 %v179
    %v235 = vpop.f32.mrf.mxu0
    %v236 = vadd.f32 0.0, %v235
    %v237 = vpop.f32.mrf.mxu0
    %v238 = vadd.f32 0.0, %v237
    %239 = vdwg.mxu0
    %v240 = vld [vmem:[%s2] sm:$0xf]
    %v241 = vld [vmem:[%s2 + $0x4] sm:$0xf]
    %v242 = vld [vmem:[%s2 + $0x8] sm:$0xf]
    %v243 = vld [vmem:[%s2 + $0xc] sm:$0xf]
    %v244 = vld [vmem:[%s2 + $0x10] sm:$0xf]
    %v245 = vld [vmem:[%s2 + $0x14] sm:$0xf]
    %v246 = vld [vmem:[%s2 + $0x18] sm:$0xf]
    %v247 = vld [vmem:[%s2 + $0x1c] sm:$0xf]
    %v256 = vunpack.c.l.b16 %v240
    %v257 = vunpack.c.l.b16 %v241
    %v258 = vunpack.c.l.b16 %v242
    %v259 = vunpack.c.l.b16 %v243
    %v260 = vunpack.c.l.b16 %v244
    %v261 = vunpack.c.l.b16 %v245
    %v262 = vunpack.c.l.b16 %v246
    %v263 = vunpack.c.l.b16 %v247
    %v264 = vpack.c.b16 %v257, %v256
    %v265 = vpack.c.b16 %v259, %v258
    %v266 = vpack.c.b16 %v261, %v260
    %v267 = vpack.c.b16 %v263, %v262
    %272 = vmatpush.bf16.msra.mxu0 0
    %273 = vmatpush.bf16.msra.mxu0 0
    %274 = vmatpush.bf16.msra.mxu0 0
    %275 = vmatpush.bf16.msra.mxu0 0
    %276 = vmatpush.bf16.msra.mxu0 %v267
    %277 = vmatpush.bf16.msra.mxu0 %v266
    %278 = vmatpush.bf16.msra.mxu0 %v265
    %279 = vmatpush.bf16.msra.mxu0 %v264
    %280 = vmatmul.bf16.gmra.mxu0 %v152
    %v281 = vpop.f32.mrf.mxu0
    %v282 = vadd.f32 0.0, %v281
    %v283 = vpop.f32.mrf.mxu0
    %v284 = vadd.f32 0.0, %v283
    %285 = vmatmul.bf16.gmra.mxu0 %v155
    %v286 = vpop.f32.mrf.mxu0
    %v287 = vadd.f32 0.0, %v286
    %v288 = vpop.f32.mrf.mxu0
    %v289 = vadd.f32 0.0, %v288
    %290 = vmatmul.bf16.gmra.mxu0 %v158
    %v291 = vpop.f32.mrf.mxu0
    %v292 = vadd.f32 0.0, %v291
    %v293 = vpop.f32.mrf.mxu0
    %v294 = vadd.f32 0.0, %v293
    %295 = vmatmul.bf16.gmra.mxu0 %v161
    %v296 = vpop.f32.mrf.mxu0
    %v297 = vadd.f32 0.0, %v296
    %v298 = vpop.f32.mrf.mxu0
    %v299 = vadd.f32 0.0, %v298
    %300 = vmatmul.bf16.gmra.mxu0 %v164
    %v301 = vpop.f32.mrf.mxu0
    %v302 = vadd.f32 0.0, %v301
    %v303 = vpop.f32.mrf.mxu0
    %v304 = vadd.f32 0.0, %v303
    %305 = vmatmul.bf16.gmra.mxu0 %v167
    %v306 = vpop.f32.mrf.mxu0
    %v307 = vadd.f32 0.0, %v306
    %v308 = vpop.f32.mrf.mxu0
    %v309 = vadd.f32 0.0, %v308
    %310 = vmatmul.bf16.gmra.mxu0 %v170
    %v311 = vpop.f32.mrf.mxu0
    %v312 = vadd.f32 0.0, %v311
    %v313 = vpop.f32.mrf.mxu0
    %v314 = vadd.f32 0.0, %v313
    %315 = vmatmul.bf16.gmra.mxu0 %v173
    %v316 = vpop.f32.mrf.mxu0
    %v317 = vadd.f32 0.0, %v316
    %v318 = vpop.f32.mrf.mxu0
    %v319 = vadd.f32 0.0, %v318
    %320 = vmatmul.bf16.gmra.mxu0 %v176
    %v321 = vpop.f32.mrf.mxu0
    %v322 = vadd.f32 0.0, %v321
    %v323 = vpop.f32.mrf.mxu0
    %v324 = vadd.f32 0.0, %v323
    %325 = vmatmul.bf16.gmra.mxu0 %v179
    %v326 = vpop.f32.mrf.mxu0
    %v327 = vadd.f32 0.0, %v326
    %v328 = vpop.f32.mrf.mxu0
    %v329 = vadd.f32 0.0, %v328
    %330 = vdwg.mxu0
    %v331 = vmul.f32 %v191, %v191
    %v332 = vmul.f32 %v193, %v193
    %v333 = vmul.f32 %v196, %v196
    %v334 = vmul.f32 %v198, %v198
    %v335 = vmul.f32 %v201, %v201
    %v336 = vmul.f32 %v203, %v203
    %v337 = vmul.f32 %v206, %v206
    %v338 = vmul.f32 %v208, %v208
    %v339 = vmul.f32 %v211, %v211
    %v340 = vmul.f32 %v213, %v213
    %v341 = vmul.f32 %v216, %v216
    %v342 = vmul.f32 %v218, %v218
    %v343 = vmul.f32 %v221, %v221
    %v344 = vmul.f32 %v223, %v223
    %v345 = vmul.f32 %v226, %v226
    %v346 = vmul.f32 %v228, %v228
    %v347 = vmul.f32 %v231, %v231
    %v348 = vmul.f32 %v233, %v233
    %v349 = vmul.f32 %v236, %v236
    %v350 = vmul.f32 %v238, %v238
    %v351 = vmul.f32 %v282, %v282
    %v352 = vmul.f32 %v284, %v284
    %v353 = vmul.f32 %v287, %v287
    %v354 = vmul.f32 %v289, %v289
    %v355 = vmul.f32 %v292, %v292
    %v356 = vmul.f32 %v294, %v294
    %v357 = vmul.f32 %v297, %v297
    %v358 = vmul.f32 %v299, %v299
    %v359 = vmul.f32 %v302, %v302
    %v360 = vmul.f32 %v304, %v304
    %v361 = vmul.f32 %v307, %v307
    %v362 = vmul.f32 %v309, %v309
    %v363 = vmul.f32 %v312, %v312
    %v364 = vmul.f32 %v314, %v314
    %v365 = vmul.f32 %v317, %v317
    %v366 = vmul.f32 %v319, %v319
    %v367 = vmul.f32 %v322, %v322
    %v368 = vmul.f32 %v324, %v324
    %v369 = vmul.f32 %v327, %v327
    %v370 = vmul.f32 %v329, %v329
    %v371 = vadd.f32 %v331, %v351
    %v372 = vadd.f32 %v332, %v352
    %v373 = vadd.f32 %v333, %v353
    %v374 = vadd.f32 %v334, %v354
    %v375 = vadd.f32 %v335, %v355
    %v376 = vadd.f32 %v336, %v356
    %v377 = vadd.f32 %v337, %v357
    %v378 = vadd.f32 %v338, %v358
    %v379 = vadd.f32 %v339, %v359
    %v380 = vadd.f32 %v340, %v360
    %v381 = vadd.f32 %v341, %v361
    %v382 = vadd.f32 %v342, %v362
    %v383 = vadd.f32 %v343, %v363
    %v384 = vadd.f32 %v344, %v364
    %v385 = vadd.f32 %v345, %v365
    %v386 = vadd.f32 %v346, %v366
    %v387 = vadd.f32 %v347, %v367
    %v388 = vadd.f32 %v348, %v368
    %v389 = vadd.f32 %v349, %v369
    %v390 = vadd.f32 %v350, %v370
    %v391 = vadd.f32 %v371, 1e-12
    %v392 = vadd.f32 %v372, 1e-12
    %v393 = vadd.f32 %v373, 1e-12
    %v394 = vadd.f32 %v374, 1e-12
    %v395 = vadd.f32 %v375, 1e-12
    %v396 = vadd.f32 %v376, 1e-12
    %v397 = vadd.f32 %v377, 1e-12
    %v398 = vadd.f32 %v378, 1e-12
    %v399 = vadd.f32 %v379, 1e-12
    %v400 = vadd.f32 %v380, 1e-12
    %v401 = vadd.f32 %v381, 1e-12
    %v402 = vadd.f32 %v382, 1e-12
    %v403 = vadd.f32 %v383, 1e-12
    %v404 = vadd.f32 %v384, 1e-12
    %v405 = vadd.f32 %v385, 1e-12
    %v406 = vadd.f32 %v386, 1e-12
    %v407 = vadd.f32 %v387, 1e-12
    %v408 = vadd.f32 %v388, 1e-12
    %v409 = vadd.f32 %v389, 1e-12
    %v410 = vadd.f32 %v390, 1e-12
    %v411 = vrsqrt.pop %v391
    %v412 = vmul.f32 %v411, %v391
    %v413 = vmul.f32 %v412, %v411
    %v414 = vmul.f32 0.5, %v413
    %v415 = vsub.f32 1.5, %v414
    %v416 = vmul.f32 %v411, %v415
    %v417 = vmul.f32 %v391, %v416
    %vm418 = vcmp.eq.f32.partialorder %v391, inf
    %v419 = vsel %vm418, %v391, %v417
    %vm420 = vcmp.eq.f32.partialorder %v391, 0.0
    %v421 = vand.u32 %v391, 2147483648
    %v422 = vsel %vm420, %v421, %v419
    %v423 = vrsqrt.pop %v392
    %v424 = vmul.f32 %v423, %v392
    %v425 = vmul.f32 %v424, %v423
    %v426 = vmul.f32 0.5, %v425
    %v427 = vsub.f32 1.5, %v426
    %v428 = vmul.f32 %v423, %v427
    %v429 = vmul.f32 %v392, %v428
    %vm430 = vcmp.eq.f32.partialorder %v392, inf
    %v431 = vsel %vm430, %v392, %v429
    %vm432 = vcmp.eq.f32.partialorder %v392, 0.0
    %v433 = vand.u32 %v392, 2147483648
    %v434 = vsel %vm432, %v433, %v431
    %v435 = vrsqrt.pop %v393
    %v436 = vmul.f32 %v435, %v393
    %v437 = vmul.f32 %v436, %v435
    %v438 = vmul.f32 0.5, %v437
    %v439 = vsub.f32 1.5, %v438
    %v440 = vmul.f32 %v435, %v439
    %v441 = vmul.f32 %v393, %v440
    %vm442 = vcmp.eq.f32.partialorder %v393, inf
    %v443 = vsel %vm442, %v393, %v441
    %vm444 = vcmp.eq.f32.partialorder %v393, 0.0
    %v445 = vand.u32 %v393, 2147483648
    %v446 = vsel %vm444, %v445, %v443
    %v447 = vrsqrt.pop %v394
    %v448 = vmul.f32 %v447, %v394
    %v449 = vmul.f32 %v448, %v447
    %v450 = vmul.f32 0.5, %v449
    %v451 = vsub.f32 1.5, %v450
    %v452 = vmul.f32 %v447, %v451
    %v453 = vmul.f32 %v394, %v452
    %vm454 = vcmp.eq.f32.partialorder %v394, inf
    %v455 = vsel %vm454, %v394, %v453
    %vm456 = vcmp.eq.f32.partialorder %v394, 0.0
    %v457 = vand.u32 %v394, 2147483648
    %v458 = vsel %vm456, %v457, %v455
    %v459 = vrsqrt.pop %v395
    %v460 = vmul.f32 %v459, %v395
    %v461 = vmul.f32 %v460, %v459
    %v462 = vmul.f32 0.5, %v461
    %v463 = vsub.f32 1.5, %v462
    %v464 = vmul.f32 %v459, %v463
    %v465 = vmul.f32 %v395, %v464
    %vm466 = vcmp.eq.f32.partialorder %v395, inf
    %v467 = vsel %vm466, %v395, %v465
    %vm468 = vcmp.eq.f32.partialorder %v395, 0.0
    %v469 = vand.u32 %v395, 2147483648
    %v470 = vsel %vm468, %v469, %v467
    %v471 = vrsqrt.pop %v396
    %v472 = vmul.f32 %v471, %v396
    %v473 = vmul.f32 %v472, %v471
    %v474 = vmul.f32 0.5, %v473
    %v475 = vsub.f32 1.5, %v474
    %v476 = vmul.f32 %v471, %v475
    %v477 = vmul.f32 %v396, %v476
    %vm478 = vcmp.eq.f32.partialorder %v396, inf
    %v479 = vsel %vm478, %v396, %v477
    %vm480 = vcmp.eq.f32.partialorder %v396, 0.0
    %v481 = vand.u32 %v396, 2147483648
    %v482 = vsel %vm480, %v481, %v479
    %v483 = vrsqrt.pop %v397
    %v484 = vmul.f32 %v483, %v397
    %v485 = vmul.f32 %v484, %v483
    %v486 = vmul.f32 0.5, %v485
    %v487 = vsub.f32 1.5, %v486
    %v488 = vmul.f32 %v483, %v487
    %v489 = vmul.f32 %v397, %v488
    %vm490 = vcmp.eq.f32.partialorder %v397, inf
    %v491 = vsel %vm490, %v397, %v489
    %vm492 = vcmp.eq.f32.partialorder %v397, 0.0
    %v493 = vand.u32 %v397, 2147483648
    %v494 = vsel %vm492, %v493, %v491
    %v495 = vrsqrt.pop %v398
    %v496 = vmul.f32 %v495, %v398
    %v497 = vmul.f32 %v496, %v495
    %v498 = vmul.f32 0.5, %v497
    %v499 = vsub.f32 1.5, %v498
    %v500 = vmul.f32 %v495, %v499
    %v501 = vmul.f32 %v398, %v500
    %vm502 = vcmp.eq.f32.partialorder %v398, inf
    %v503 = vsel %vm502, %v398, %v501
    %vm504 = vcmp.eq.f32.partialorder %v398, 0.0
    %v505 = vand.u32 %v398, 2147483648
    %v506 = vsel %vm504, %v505, %v503
    %v507 = vrsqrt.pop %v399
    %v508 = vmul.f32 %v507, %v399
    %v509 = vmul.f32 %v508, %v507
    %v510 = vmul.f32 0.5, %v509
    %v511 = vsub.f32 1.5, %v510
    %v512 = vmul.f32 %v507, %v511
    %v513 = vmul.f32 %v399, %v512
    %vm514 = vcmp.eq.f32.partialorder %v399, inf
    %v515 = vsel %vm514, %v399, %v513
    %vm516 = vcmp.eq.f32.partialorder %v399, 0.0
    %v517 = vand.u32 %v399, 2147483648
    %v518 = vsel %vm516, %v517, %v515
    %v519 = vrsqrt.pop %v400
    %v520 = vmul.f32 %v519, %v400
    %v521 = vmul.f32 %v520, %v519
    %v522 = vmul.f32 0.5, %v521
    %v523 = vsub.f32 1.5, %v522
    %v524 = vmul.f32 %v519, %v523
    %v525 = vmul.f32 %v400, %v524
    %vm526 = vcmp.eq.f32.partialorder %v400, inf
    %v527 = vsel %vm526, %v400, %v525
    %vm528 = vcmp.eq.f32.partialorder %v400, 0.0
    %v529 = vand.u32 %v400, 2147483648
    %v530 = vsel %vm528, %v529, %v527
    %v531 = vrsqrt.pop %v401
    %v532 = vmul.f32 %v531, %v401
    %v533 = vmul.f32 %v532, %v531
    %v534 = vmul.f32 0.5, %v533
    %v535 = vsub.f32 1.5, %v534
    %v536 = vmul.f32 %v531, %v535
    %v537 = vmul.f32 %v401, %v536
    %vm538 = vcmp.eq.f32.partialorder %v401, inf
    %v539 = vsel %vm538, %v401, %v537
    %vm540 = vcmp.eq.f32.partialorder %v401, 0.0
    %v541 = vand.u32 %v401, 2147483648
    %v542 = vsel %vm540, %v541, %v539
    %v543 = vrsqrt.pop %v402
    %v544 = vmul.f32 %v543, %v402
    %v545 = vmul.f32 %v544, %v543
    %v546 = vmul.f32 0.5, %v545
    %v547 = vsub.f32 1.5, %v546
    %v548 = vmul.f32 %v543, %v547
    %v549 = vmul.f32 %v402, %v548
    %vm550 = vcmp.eq.f32.partialorder %v402, inf
    %v551 = vsel %vm550, %v402, %v549
    %vm552 = vcmp.eq.f32.partialorder %v402, 0.0
    %v553 = vand.u32 %v402, 2147483648
    %v554 = vsel %vm552, %v553, %v551
    %v555 = vrsqrt.pop %v403
    %v556 = vmul.f32 %v555, %v403
    %v557 = vmul.f32 %v556, %v555
    %v558 = vmul.f32 0.5, %v557
    %v559 = vsub.f32 1.5, %v558
    %v560 = vmul.f32 %v555, %v559
    %v561 = vmul.f32 %v403, %v560
    %vm562 = vcmp.eq.f32.partialorder %v403, inf
    %v563 = vsel %vm562, %v403, %v561
    %vm564 = vcmp.eq.f32.partialorder %v403, 0.0
    %v565 = vand.u32 %v403, 2147483648
    %v566 = vsel %vm564, %v565, %v563
    %v567 = vrsqrt.pop %v404
    %v568 = vmul.f32 %v567, %v404
    %v569 = vmul.f32 %v568, %v567
    %v570 = vmul.f32 0.5, %v569
    %v571 = vsub.f32 1.5, %v570
    %v572 = vmul.f32 %v567, %v571
    %v573 = vmul.f32 %v404, %v572
    %vm574 = vcmp.eq.f32.partialorder %v404, inf
    %v575 = vsel %vm574, %v404, %v573
    %vm576 = vcmp.eq.f32.partialorder %v404, 0.0
    %v577 = vand.u32 %v404, 2147483648
    %v578 = vsel %vm576, %v577, %v575
    %v579 = vrsqrt.pop %v405
    %v580 = vmul.f32 %v579, %v405
    %v581 = vmul.f32 %v580, %v579
    %v582 = vmul.f32 0.5, %v581
    %v583 = vsub.f32 1.5, %v582
    %v584 = vmul.f32 %v579, %v583
    %v585 = vmul.f32 %v405, %v584
    %vm586 = vcmp.eq.f32.partialorder %v405, inf
    %v587 = vsel %vm586, %v405, %v585
    %vm588 = vcmp.eq.f32.partialorder %v405, 0.0
    %v589 = vand.u32 %v405, 2147483648
    %v590 = vsel %vm588, %v589, %v587
    %v591 = vrsqrt.pop %v406
    %v592 = vmul.f32 %v591, %v406
    %v593 = vmul.f32 %v592, %v591
    %v594 = vmul.f32 0.5, %v593
    %v595 = vsub.f32 1.5, %v594
    %v596 = vmul.f32 %v591, %v595
    %v597 = vmul.f32 %v406, %v596
    %vm598 = vcmp.eq.f32.partialorder %v406, inf
    %v599 = vsel %vm598, %v406, %v597
    %vm600 = vcmp.eq.f32.partialorder %v406, 0.0
    %v601 = vand.u32 %v406, 2147483648
    %v602 = vsel %vm600, %v601, %v599
    %v603 = vrsqrt.pop %v407
    %v604 = vmul.f32 %v603, %v407
    %v605 = vmul.f32 %v604, %v603
    %v606 = vmul.f32 0.5, %v605
    %v607 = vsub.f32 1.5, %v606
    %v608 = vmul.f32 %v603, %v607
    %v609 = vmul.f32 %v407, %v608
    %vm610 = vcmp.eq.f32.partialorder %v407, inf
    %v611 = vsel %vm610, %v407, %v609
    %vm612 = vcmp.eq.f32.partialorder %v407, 0.0
    %v613 = vand.u32 %v407, 2147483648
    %v614 = vsel %vm612, %v613, %v611
    %v615 = vrsqrt.pop %v408
    %v616 = vmul.f32 %v615, %v408
    %v617 = vmul.f32 %v616, %v615
    %v618 = vmul.f32 0.5, %v617
    %v619 = vsub.f32 1.5, %v618
    %v620 = vmul.f32 %v615, %v619
    %v621 = vmul.f32 %v408, %v620
    %vm622 = vcmp.eq.f32.partialorder %v408, inf
    %v623 = vsel %vm622, %v408, %v621
    %vm624 = vcmp.eq.f32.partialorder %v408, 0.0
    %v625 = vand.u32 %v408, 2147483648
    %v626 = vsel %vm624, %v625, %v623
    %v627 = vrsqrt.pop %v409
    %v628 = vmul.f32 %v627, %v409
    %v629 = vmul.f32 %v628, %v627
    %v630 = vmul.f32 0.5, %v629
    %v631 = vsub.f32 1.5, %v630
    %v632 = vmul.f32 %v627, %v631
    %v633 = vmul.f32 %v409, %v632
    %vm634 = vcmp.eq.f32.partialorder %v409, inf
    %v635 = vsel %vm634, %v409, %v633
    %vm636 = vcmp.eq.f32.partialorder %v409, 0.0
    %v637 = vand.u32 %v409, 2147483648
    %v638 = vsel %vm636, %v637, %v635
    %v639 = vrsqrt.pop %v410
    %v640 = vmul.f32 %v639, %v410
    %v641 = vmul.f32 %v640, %v639
    %v642 = vmul.f32 0.5, %v641
    %v643 = vsub.f32 1.5, %v642
    %v644 = vmul.f32 %v639, %v643
    %v645 = vmul.f32 %v410, %v644
    %vm646 = vcmp.eq.f32.partialorder %v410, inf
    %v647 = vsel %vm646, %v410, %v645
    %vm648 = vcmp.eq.f32.partialorder %v410, 0.0
    %v649 = vand.u32 %v410, 2147483648
    %v650 = vsel %vm648, %v649, %v647
    %v651 = vpack.c.bf16 %v434, %v422
    %v652 = vpack.c.bf16 %v458, %v446
    %v653 = vpack.c.bf16 %v482, %v470
    %v654 = vpack.c.bf16 %v506, %v494
    %v655 = vpack.c.bf16 %v530, %v518
    %v656 = vpack.c.bf16 %v554, %v542
    %v657 = vpack.c.bf16 %v578, %v566
    %v658 = vpack.c.bf16 %v602, %v590
    %v659 = vpack.c.bf16 %v626, %v614
    %v660 = vpack.c.bf16 %v650, %v638
    %v661 = vld [vmem:[%s3] sm:$0xf]
    %v662 = vld [vmem:[%s3 + $0x4] sm:$0xf]
    %v663 = vld [vmem:[%s3 + $0x8] sm:$0xf]
    %v664 = vld [vmem:[%s3 + $0xc] sm:$0xf]
    %v665 = vld [vmem:[%s3 + $0x10] sm:$0x1]
    %v671 = vunpack.c.l.b16 %v661
    %v672 = vunpack.c.l.b16 %v662
    %v673 = vunpack.c.l.b16 %v663
    %v674 = vunpack.c.l.b16 %v664
    %v675 = vunpack.c.l.b16 %v665
    %v676 = vpack.c.b16 %v672, %v671
    %v677 = vpack.c.b16 %v674, %v673
    %v678 = vpack.c.b16 %v675, %v675
    %vm681 = vcmask 269312
    %v683 = vsel %vm681, %v651, 0
    %v686 = vsel %vm681, %v652, 0
    %v689 = vsel %vm681, %v653, 0
    %v692 = vsel %vm681, %v654, 0
    %v695 = vsel %vm681, %v655, 0
    %v698 = vsel %vm681, %v656, 0
    %v701 = vsel %vm681, %v657, 0
    %v704 = vsel %vm681, %v658, 0
    %v707 = vsel %vm681, %v659, 0
    %v710 = vsel %vm681, %v660, 0
    %vm712 = vcmask 1040384
    %v713 = vsel 0, 4294967295, 65535
    %v714 = vsel %vm712, %v713, 0
    %v716 = vand.u32 %v678, %v714
    %718 = vmatpush.bf16.msra.mxu0 0
    %719 = vmatpush.bf16.msra.mxu0 0
    %720 = vmatpush.bf16.msra.mxu0 0
    %721 = vmatpush.bf16.msra.mxu0 0
    %722 = vmatpush.bf16.msra.mxu0 0
    %723 = vmatpush.bf16.msra.mxu0 %v716
    %724 = vmatpush.bf16.msra.mxu0 %v677
    %725 = vmatpush.bf16.msra.mxu0 %v676
    %726 = vmatmul.bf16.gmra.mxu0 %v683
    %v727 = vpop.f32.mrf.mxu0
    %v728 = vadd.f32 1e-09, %v727
    %v729 = vpop.f32.mrf.mxu0
    %v730 = vadd.f32 1e-09, %v729
    %731 = vmatmul.bf16.gmra.mxu0 %v686
    %v732 = vpop.f32.mrf.mxu0
    %v733 = vadd.f32 1e-09, %v732
    %v734 = vpop.f32.mrf.mxu0
    %v735 = vadd.f32 1e-09, %v734
    %736 = vmatmul.bf16.gmra.mxu0 %v689
    %v737 = vpop.f32.mrf.mxu0
    %v738 = vadd.f32 1e-09, %v737
    %v739 = vpop.f32.mrf.mxu0
    %v740 = vadd.f32 1e-09, %v739
    %741 = vmatmul.bf16.gmra.mxu0 %v692
    %v742 = vpop.f32.mrf.mxu0
    %v743 = vadd.f32 1e-09, %v742
    %v744 = vpop.f32.mrf.mxu0
    %v745 = vadd.f32 1e-09, %v744
    %746 = vmatmul.bf16.gmra.mxu0 %v695
    %v747 = vpop.f32.mrf.mxu0
    %v748 = vadd.f32 1e-09, %v747
    %v749 = vpop.f32.mrf.mxu0
    %v750 = vadd.f32 1e-09, %v749
    %751 = vmatmul.bf16.gmra.mxu0 %v698
    %v752 = vpop.f32.mrf.mxu0
    %v753 = vadd.f32 1e-09, %v752
    %v754 = vpop.f32.mrf.mxu0
    %v755 = vadd.f32 1e-09, %v754
    %756 = vmatmul.bf16.gmra.mxu0 %v701
    %v757 = vpop.f32.mrf.mxu0
    %v758 = vadd.f32 1e-09, %v757
    %v759 = vpop.f32.mrf.mxu0
    %v760 = vadd.f32 1e-09, %v759
    %761 = vmatmul.bf16.gmra.mxu0 %v704
    %v762 = vpop.f32.mrf.mxu0
    %v763 = vadd.f32 1e-09, %v762
    %v764 = vpop.f32.mrf.mxu0
    %v765 = vadd.f32 1e-09, %v764
    %766 = vmatmul.bf16.gmra.mxu0 %v707
    %v767 = vpop.f32.mrf.mxu0
    %v768 = vadd.f32 1e-09, %v767
    %v769 = vpop.f32.mrf.mxu0
    %v770 = vadd.f32 1e-09, %v769
    %771 = vmatmul.bf16.gmra.mxu0 %v710
    %v772 = vpop.f32.mrf.mxu0
    %v773 = vadd.f32 1e-09, %v772
    %v774 = vpop.f32.mrf.mxu0
    %v775 = vadd.f32 1e-09, %v774
    %776 = vdwg.mxu0
    %v777 = vlog2.pop %v728
    %v778 = vmul.f32 %v777, 0.6931472
    %v779 = vlog2.pop %v730
    %v780 = vmul.f32 %v779, 0.6931472
    %v781 = vlog2.pop %v733
    %v782 = vmul.f32 %v781, 0.6931472
    %v783 = vlog2.pop %v735
    %v784 = vmul.f32 %v783, 0.6931472
    %v785 = vlog2.pop %v738
    %v786 = vmul.f32 %v785, 0.6931472
    %v787 = vlog2.pop %v740
    %v788 = vmul.f32 %v787, 0.6931472
    %v789 = vlog2.pop %v743
    %v790 = vmul.f32 %v789, 0.6931472
    %v791 = vlog2.pop %v745
    %v792 = vmul.f32 %v791, 0.6931472
    %v793 = vlog2.pop %v748
    %v794 = vmul.f32 %v793, 0.6931472
    %v795 = vlog2.pop %v750
    %v796 = vmul.f32 %v795, 0.6931472
    %v797 = vlog2.pop %v753
    %v798 = vmul.f32 %v797, 0.6931472
    %v799 = vlog2.pop %v755
    %v800 = vmul.f32 %v799, 0.6931472
    %v801 = vlog2.pop %v758
    %v802 = vmul.f32 %v801, 0.6931472
    %v803 = vlog2.pop %v760
    %v804 = vmul.f32 %v803, 0.6931472
    %v805 = vlog2.pop %v763
    %v806 = vmul.f32 %v805, 0.6931472
    %v807 = vlog2.pop %v765
    %v808 = vmul.f32 %v807, 0.6931472
    %v809 = vlog2.pop %v768
    %v810 = vmul.f32 %v809, 0.6931472
    %v811 = vlog2.pop %v770
    %v812 = vmul.f32 %v811, 0.6931472
    %v813 = vlog2.pop %v773
    %v814 = vmul.f32 %v813, 0.6931472
    %v815 = vlog2.pop %v775
    %v816 = vmul.f32 %v815, 0.6931472
    %v817 = vld [vmem:[%s4] sm:$0xff]
    %v818 = vld [vmem:[%s4 + $0x8] sm:$0xff]
    %v819 = vld [vmem:[%s5] sm:$0x1]
    %v821 = vperm.slane %v819, 0
    %vm823 = vcmask 130048
    %v825 = vsel %vm823, %v778, 0
    %v828 = vsel %vm823, %v780, 0
    %v831 = vsel %vm823, %v782, 0
    %v834 = vsel %vm823, %v784, 0
    %v837 = vsel %vm823, %v786, 0
    %v840 = vsel %vm823, %v788, 0
    %v843 = vsel %vm823, %v790, 0
    %v846 = vsel %vm823, %v792, 0
    %v849 = vsel %vm823, %v794, 0
    %v852 = vsel %vm823, %v796, 0
    %854 = vmatpush.msra.mxu0 0.0
    %855 = vmatpush.msra.mxu0 0.0
    %856 = vmatpush.msra.mxu0 0.0
    %857 = vmatpush.msra.mxu0 0.0
    %858 = vmatpush.msra.mxu0 0.0
    %859 = vmatpush.msra.mxu0 0.0
    %860 = vmatpush.msra.mxu0 0.0
    %861 = vmatpush.msra.mxu0 0.0
    %862 = vmatpush.msra.mxu0 0.0
    %863 = vmatpush.msra.mxu0 0.0
    %864 = vmatpush.msra.mxu0 0.0
    %865 = vmatpush.msra.mxu0 0.0
    %866 = vmatpush.msra.mxu0 0.0
    %867 = vmatpush.msra.mxu0 0.0
    %868 = vmatpush.msra.mxu0 %v818
    %869 = vmatpush.msra.mxu0 %v817
    %870 = vmatmul.f32.gmra.mxu0 %v825
    %v871 = vpop.f32.mrf.mxu0
    %v872 = vadd.f32 %v821, %v871
    %873 = vmatmul.f32.gmra.mxu0 %v828
    %v874 = vpop.f32.mrf.mxu0
    %v875 = vadd.f32 %v821, %v874
    %876 = vmatmul.f32.gmra.mxu0 %v831
    %v877 = vpop.f32.mrf.mxu0
    %v878 = vadd.f32 %v821, %v877
    %879 = vmatmul.f32.gmra.mxu0 %v834
    %v880 = vpop.f32.mrf.mxu0
    %v881 = vadd.f32 %v821, %v880
    %882 = vmatmul.f32.gmra.mxu0 %v837
    %v883 = vpop.f32.mrf.mxu0
    %v884 = vadd.f32 %v821, %v883
    %885 = vmatmul.f32.gmra.mxu0 %v840
    %v886 = vpop.f32.mrf.mxu0
    %v887 = vadd.f32 %v821, %v886
    %888 = vmatmul.f32.gmra.mxu0 %v843
    %v889 = vpop.f32.mrf.mxu0
    %v890 = vadd.f32 %v821, %v889
    %891 = vmatmul.f32.gmra.mxu0 %v846
    %v892 = vpop.f32.mrf.mxu0
    %v893 = vadd.f32 %v821, %v892
    %894 = vmatmul.f32.gmra.mxu0 %v849
    %v895 = vpop.f32.mrf.mxu0
    %v896 = vadd.f32 %v821, %v895
    %897 = vmatmul.f32.gmra.mxu0 %v852
    %v898 = vpop.f32.mrf.mxu0
    %v899 = vadd.f32 %v821, %v898
    %900 = vdwg.mxu0
    %v901 = vld [vmem:[%s6] sm:$0xff]
    %v902 = vld [vmem:[%s6 + $0x8] sm:$0xff]
    %v903 = vld [vmem:[%s7] sm:$0x1]
    %v905 = vperm.slane %v903, 0
    %907 = vmatpush.msra.mxu0 0.0
    %908 = vmatpush.msra.mxu0 0.0
    %909 = vmatpush.msra.mxu0 0.0
    %910 = vmatpush.msra.mxu0 0.0
    %911 = vmatpush.msra.mxu0 0.0
    %912 = vmatpush.msra.mxu0 0.0
    %913 = vmatpush.msra.mxu0 0.0
    %914 = vmatpush.msra.mxu0 0.0
    %915 = vmatpush.msra.mxu0 0.0
    %916 = vmatpush.msra.mxu0 0.0
    %917 = vmatpush.msra.mxu0 0.0
    %918 = vmatpush.msra.mxu0 0.0
    %919 = vmatpush.msra.mxu0 0.0
    %920 = vmatpush.msra.mxu0 0.0
    %921 = vmatpush.msra.mxu0 %v902
    %922 = vmatpush.msra.mxu0 %v901
    %923 = vmatmul.f32.gmra.mxu0 %v825
    %v924 = vpop.f32.mrf.mxu0
    %v925 = vadd.f32 %v905, %v924
    %926 = vmatmul.f32.gmra.mxu0 %v828
    %v927 = vpop.f32.mrf.mxu0
    %v928 = vadd.f32 %v905, %v927
    %929 = vmatmul.f32.gmra.mxu0 %v831
    %v930 = vpop.f32.mrf.mxu0
    %v931 = vadd.f32 %v905, %v930
    %932 = vmatmul.f32.gmra.mxu0 %v834
    %v933 = vpop.f32.mrf.mxu0
    %v934 = vadd.f32 %v905, %v933
    %935 = vmatmul.f32.gmra.mxu0 %v837
    %v936 = vpop.f32.mrf.mxu0
    %v937 = vadd.f32 %v905, %v936
    %938 = vmatmul.f32.gmra.mxu0 %v840
    %v939 = vpop.f32.mrf.mxu0
    %v940 = vadd.f32 %v905, %v939
    %941 = vmatmul.f32.gmra.mxu0 %v843
    %v942 = vpop.f32.mrf.mxu0
    %v943 = vadd.f32 %v905, %v942
    %944 = vmatmul.f32.gmra.mxu0 %v846
    %v945 = vpop.f32.mrf.mxu0
    %v946 = vadd.f32 %v905, %v945
    %947 = vmatmul.f32.gmra.mxu0 %v849
    %v948 = vpop.f32.mrf.mxu0
    %v949 = vadd.f32 %v905, %v948
    %950 = vmatmul.f32.gmra.mxu0 %v852
    %v951 = vpop.f32.mrf.mxu0
    %v952 = vadd.f32 %v905, %v951
    %953 = vdwg.mxu0
    %v954 = vld [vmem:[%s8] sm:$0xff]
    %v955 = vld [vmem:[%s8 + $0x8] sm:$0xff]
    %v956 = vld [vmem:[%s9] sm:$0x1]
    %v958 = vperm.slane %v956, 0
    %v961 = vsel %vm823, %v798, 0
    %v964 = vsel %vm823, %v800, 0
    %v967 = vsel %vm823, %v802, 0
    %v970 = vsel %vm823, %v804, 0
    %v973 = vsel %vm823, %v806, 0
    %v976 = vsel %vm823, %v808, 0
    %v979 = vsel %vm823, %v810, 0
    %v982 = vsel %vm823, %v812, 0
    %v985 = vsel %vm823, %v814, 0
    %v988 = vsel %vm823, %v816, 0
    %990 = vmatpush.msra.mxu0 0.0
    %991 = vmatpush.msra.mxu0 0.0
    %992 = vmatpush.msra.mxu0 0.0
    %993 = vmatpush.msra.mxu0 0.0
    %994 = vmatpush.msra.mxu0 0.0
    %995 = vmatpush.msra.mxu0 0.0
    %996 = vmatpush.msra.mxu0 0.0
    %997 = vmatpush.msra.mxu0 0.0
    %998 = vmatpush.msra.mxu0 0.0
    %999 = vmatpush.msra.mxu0 0.0
    %1000 = vmatpush.msra.mxu0 0.0
    %1001 = vmatpush.msra.mxu0 0.0
    %1002 = vmatpush.msra.mxu0 0.0
    %1003 = vmatpush.msra.mxu0 0.0
    %1004 = vmatpush.msra.mxu0 %v955
    %1005 = vmatpush.msra.mxu0 %v954
    %1006 = vmatmul.f32.gmra.mxu0 %v825
    %v1007 = vpop.f32.mrf.mxu0
    %v1008 = vadd.f32 %v958, %v1007
    %1009 = vmatmul.f32.gmra.mxu0 %v828
    %v1010 = vpop.f32.mrf.mxu0
    %v1011 = vadd.f32 %v958, %v1010
    %1012 = vmatmul.f32.gmra.mxu0 %v831
    %v1013 = vpop.f32.mrf.mxu0
    %v1014 = vadd.f32 %v958, %v1013
    %1015 = vmatmul.f32.gmra.mxu0 %v834
    %v1016 = vpop.f32.mrf.mxu0
    %v1017 = vadd.f32 %v958, %v1016
    %1018 = vmatmul.f32.gmra.mxu0 %v837
    %v1019 = vpop.f32.mrf.mxu0
    %v1020 = vadd.f32 %v958, %v1019
    %1021 = vmatmul.f32.gmra.mxu0 %v840
    %v1022 = vpop.f32.mrf.mxu0
    %v1023 = vadd.f32 %v958, %v1022
    %1024 = vmatmul.f32.gmra.mxu0 %v843
    %v1025 = vpop.f32.mrf.mxu0
    %v1026 = vadd.f32 %v958, %v1025
    %1027 = vmatmul.f32.gmra.mxu0 %v846
    %v1028 = vpop.f32.mrf.mxu0
    %v1029 = vadd.f32 %v958, %v1028
    %1030 = vmatmul.f32.gmra.mxu0 %v849
    %v1031 = vpop.f32.mrf.mxu0
    %v1032 = vadd.f32 %v958, %v1031
    %1033 = vmatmul.f32.gmra.mxu0 %v852
    %v1034 = vpop.f32.mrf.mxu0
    %v1035 = vadd.f32 %v958, %v1034
    %1036 = vmatmul.f32.gmra.mxu0 %v961
    %v1037 = vpop.f32.mrf.mxu0
    %v1038 = vadd.f32 %v958, %v1037
    %1039 = vmatmul.f32.gmra.mxu0 %v964
    %v1040 = vpop.f32.mrf.mxu0
    %v1041 = vadd.f32 %v958, %v1040
    %1042 = vmatmul.f32.gmra.mxu0 %v967
    %v1043 = vpop.f32.mrf.mxu0
    %v1044 = vadd.f32 %v958, %v1043
    %1045 = vmatmul.f32.gmra.mxu0 %v970
    %v1046 = vpop.f32.mrf.mxu0
    %v1047 = vadd.f32 %v958, %v1046
    %1048 = vmatmul.f32.gmra.mxu0 %v973
    %v1049 = vpop.f32.mrf.mxu0
    %v1050 = vadd.f32 %v958, %v1049
    %1051 = vmatmul.f32.gmra.mxu0 %v976
    %v1052 = vpop.f32.mrf.mxu0
    %v1053 = vadd.f32 %v958, %v1052
    %1054 = vmatmul.f32.gmra.mxu0 %v979
    %v1055 = vpop.f32.mrf.mxu0
    %v1056 = vadd.f32 %v958, %v1055
    %1057 = vmatmul.f32.gmra.mxu0 %v982
    %v1058 = vpop.f32.mrf.mxu0
    %v1059 = vadd.f32 %v958, %v1058
    %1060 = vmatmul.f32.gmra.mxu0 %v985
    %v1061 = vpop.f32.mrf.mxu0
    %v1062 = vadd.f32 %v958, %v1061
    %1063 = vmatmul.f32.gmra.mxu0 %v988
    %v1064 = vpop.f32.mrf.mxu0
    %v1065 = vadd.f32 %v958, %v1064
    %1066 = vdwg.mxu0
    %v1067 = vtanh.pop %v1008
    %v1068 = vtanh.pop %v1011
    %v1069 = vtanh.pop %v1014
    %v1070 = vtanh.pop %v1017
    %v1071 = vtanh.pop %v1020
    %v1072 = vtanh.pop %v1023
    %v1073 = vtanh.pop %v1026
    %v1074 = vtanh.pop %v1029
    %v1075 = vtanh.pop %v1032
    %v1076 = vtanh.pop %v1035
    %v1077 = vtanh.pop %v1038
    %v1078 = vtanh.pop %v1041
    %v1079 = vtanh.pop %v1044
    %v1080 = vtanh.pop %v1047
    %v1081 = vtanh.pop %v1050
    %v1082 = vtanh.pop %v1053
    %v1083 = vtanh.pop %v1056
    %v1084 = vtanh.pop %v1059
    %v1085 = vtanh.pop %v1062
    %v1086 = vtanh.pop %v1065
    %vm1087 = vcmask 261120
    %v1088 = vsel %vm1087, %v1067, 0.0
    %v1089 = vsel %vm1087, %v1068, 0.0
    %v1090 = vadd.f32 %v1088, %v1089
    %v1091 = vsel %vm1087, %v1069, 0.0
    %v1092 = vadd.f32 %v1090, %v1091
    %v1093 = vsel %vm1087, %v1070, 0.0
    %v1094 = vadd.f32 %v1092, %v1093
    %v1095 = vsel %vm1087, %v1071, 0.0
    %v1096 = vadd.f32 %v1094, %v1095
    %v1097 = vrot.slane %v1096, 4
    %v1098 = vadd.f32 %v1096, %v1097
    %v1099 = vrot.slane %v1098, 2
    %v1100 = vadd.f32 %v1098, %v1099
    %v1101 = vrot.slane %v1100, 1
    %v1102 = vadd.f32 %v1100, %v1101
    %v1103 = vrcp.pop 40.0
    %v1104 = vmul.f32 40.0, %v1103
    %v1105 = vsub.f32 1.0, %v1104
    %v1106 = vmul.f32 %v1103, %v1105
    %v1107 = vadd.f32 %v1103, %v1106
    %vm1108 = vweird.f32 %v1103
    %v1109 = vsel %vm1108, %v1103, %v1107
    %v1110 = vmul.f32 %v1102, %v1109
    %v1111 = vsel %vm1087, %v1072, 0.0
    %v1112 = vsel %vm1087, %v1073, 0.0
    %v1113 = vadd.f32 %v1111, %v1112
    %v1114 = vsel %vm1087, %v1074, 0.0
    %v1115 = vadd.f32 %v1113, %v1114
    %v1116 = vsel %vm1087, %v1075, 0.0
    %v1117 = vadd.f32 %v1115, %v1116
    %v1118 = vsel %vm1087, %v1076, 0.0
    %v1119 = vadd.f32 %v1117, %v1118
    %v1120 = vrot.slane %v1119, 4
    %v1121 = vadd.f32 %v1119, %v1120
    %v1122 = vrot.slane %v1121, 2
    %v1123 = vadd.f32 %v1121, %v1122
    %v1124 = vrot.slane %v1123, 1
    %v1125 = vadd.f32 %v1123, %v1124
    %v1126 = vmul.f32 %v1125, %v1109
    %v1127 = vsel %vm1087, %v1077, 0.0
    %v1128 = vsel %vm1087, %v1078, 0.0
    %v1129 = vadd.f32 %v1127, %v1128
    %v1130 = vsel %vm1087, %v1079, 0.0
    %v1131 = vadd.f32 %v1129, %v1130
    %v1132 = vsel %vm1087, %v1080, 0.0
    %v1133 = vadd.f32 %v1131, %v1132
    %v1134 = vsel %vm1087, %v1081, 0.0
    %v1135 = vadd.f32 %v1133, %v1134
    %v1136 = vrot.slane %v1135, 4
    %v1137 = vadd.f32 %v1135, %v1136
    %v1138 = vrot.slane %v1137, 2
    %v1139 = vadd.f32 %v1137, %v1138
    %v1140 = vrot.slane %v1139, 1
    %v1141 = vadd.f32 %v1139, %v1140
    %v1142 = vmul.f32 %v1141, %v1109
    %v1143 = vsel %vm1087, %v1082, 0.0
    %v1144 = vsel %vm1087, %v1083, 0.0
    %v1145 = vadd.f32 %v1143, %v1144
    %v1146 = vsel %vm1087, %v1084, 0.0
    %v1147 = vadd.f32 %v1145, %v1146
    %v1148 = vsel %vm1087, %v1085, 0.0
    %v1149 = vadd.f32 %v1147, %v1148
    %v1150 = vsel %vm1087, %v1086, 0.0
    %v1151 = vadd.f32 %v1149, %v1150
    %v1152 = vrot.slane %v1151, 4
    %v1153 = vadd.f32 %v1151, %v1152
    %v1154 = vrot.slane %v1153, 2
    %v1155 = vadd.f32 %v1153, %v1154
    %v1156 = vrot.slane %v1155, 1
    %v1157 = vadd.f32 %v1155, %v1156
    %v1158 = vmul.f32 %v1157, %v1109
    %v1159 = vtanh.pop %v872
    %v1160 = vtanh.pop %v875
    %v1161 = vtanh.pop %v878
    %v1162 = vtanh.pop %v881
    %v1163 = vtanh.pop %v884
    %v1164 = vtanh.pop %v887
    %v1165 = vtanh.pop %v890
    %v1166 = vtanh.pop %v893
    %v1167 = vtanh.pop %v896
    %v1168 = vtanh.pop %v899
    %v1169 = vld [vmem:[%s10] sm:$0xff]
    %v1170 = vld [vmem:[%s10 + $0x8] sm:$0xff]
    %v1171 = vld [vmem:[%s10 + $0x10] sm:$0xff]
    %v1172 = vld [vmem:[%s10 + $0x18] sm:$0xff]
    %v1173 = vld [vmem:[%s11] sm:$0xff]
    %v1174 = vld [vmem:[%s11 + $0x8] sm:$0xff]
    %v1175 = vld [vmem:[%s11 + $0x10] sm:$0xff]
    %v1176 = vld [vmem:[%s11 + $0x18] sm:$0xff]
    %v1178 = vsel %vm1087, %v1110, 0
    %1180 = vmatpush.msra.mxu0 0.0
    %1181 = vmatpush.msra.mxu0 0.0
    %1182 = vmatpush.msra.mxu0 0.0
    %1183 = vmatpush.msra.mxu0 0.0
    %1184 = vmatpush.msra.mxu0 0.0
    %1185 = vmatpush.msra.mxu0 0.0
    %1186 = vmatpush.msra.mxu0 0.0
    %1187 = vmatpush.msra.mxu0 0.0
    %1188 = vmatpush.msra.mxu0 0.0
    %1189 = vmatpush.msra.mxu0 0.0
    %1190 = vmatpush.msra.mxu0 0.0
    %1191 = vmatpush.msra.mxu0 0.0
    %1192 = vmatpush.msra.mxu0 %v1176
    %1193 = vmatpush.msra.mxu0 %v1175
    %1194 = vmatpush.msra.mxu0 %v1174
    %1195 = vmatpush.msra.mxu0 %v1173
    %1196 = vmatmul.f32.gmra.mxu0 %v1178
    %v1197 = vpop.f32.mrf.mxu0
    %v1198 = vadd.f32 0.0, %v1197
    %1199 = vdwg.mxu0
    %v1200 = vperm.slane %v1198, 0
    %v1202 = vsel %vm1087, %v1126, 0
    %1204 = vmatpush.msra.mxu0 0.0
    %1205 = vmatpush.msra.mxu0 0.0
    %1206 = vmatpush.msra.mxu0 0.0
    %1207 = vmatpush.msra.mxu0 0.0
    %1208 = vmatpush.msra.mxu0 0.0
    %1209 = vmatpush.msra.mxu0 0.0
    %1210 = vmatpush.msra.mxu0 0.0
    %1211 = vmatpush.msra.mxu0 0.0
    %1212 = vmatpush.msra.mxu0 0.0
    %1213 = vmatpush.msra.mxu0 0.0
    %1214 = vmatpush.msra.mxu0 0.0
    %1215 = vmatpush.msra.mxu0 0.0
    %1216 = vmatpush.msra.mxu0 %v1176
    %1217 = vmatpush.msra.mxu0 %v1175
    %1218 = vmatpush.msra.mxu0 %v1174
    %1219 = vmatpush.msra.mxu0 %v1173
    %1220 = vmatmul.f32.gmra.mxu0 %v1202
    %v1221 = vpop.f32.mrf.mxu0
    %v1222 = vadd.f32 0.0, %v1221
    %1223 = vdwg.mxu0
    %v1224 = vperm.slane %v1222, 0
    %v1226 = vsel %vm1087, %v1159, 0
    %v1229 = vsel %vm1087, %v1160, 0
    %v1232 = vsel %vm1087, %v1161, 0
    %v1235 = vsel %vm1087, %v1162, 0
    %v1238 = vsel %vm1087, %v1163, 0
    %v1241 = vsel %vm1087, %v1164, 0
    %v1244 = vsel %vm1087, %v1165, 0
    %v1247 = vsel %vm1087, %v1166, 0
    %v1250 = vsel %vm1087, %v1167, 0
    %v1253 = vsel %vm1087, %v1168, 0
    %1255 = vmatpush.msra.mxu0 0.0
    %1256 = vmatpush.msra.mxu0 0.0
    %1257 = vmatpush.msra.mxu0 0.0
    %1258 = vmatpush.msra.mxu0 0.0
    %1259 = vmatpush.msra.mxu0 0.0
    %1260 = vmatpush.msra.mxu0 0.0
    %1261 = vmatpush.msra.mxu0 0.0
    %1262 = vmatpush.msra.mxu0 0.0
    %1263 = vmatpush.msra.mxu0 0.0
    %1264 = vmatpush.msra.mxu0 0.0
    %1265 = vmatpush.msra.mxu0 0.0
    %1266 = vmatpush.msra.mxu0 0.0
    %1267 = vmatpush.msra.mxu0 %v1172
    %1268 = vmatpush.msra.mxu0 %v1171
    %1269 = vmatpush.msra.mxu0 %v1170
    %1270 = vmatpush.msra.mxu0 %v1169
    %1271 = vmatmul.f32.gmra.mxu0 %v1226
    %v1272 = vpop.f32.mrf.mxu0
    %v1273 = vadd.f32 %v1200, %v1272
    %1274 = vmatmul.f32.gmra.mxu0 %v1229
    %v1275 = vpop.f32.mrf.mxu0
    %v1276 = vadd.f32 %v1200, %v1275
    %1277 = vmatmul.f32.gmra.mxu0 %v1232
    %v1278 = vpop.f32.mrf.mxu0
    %v1279 = vadd.f32 %v1200, %v1278
    %1280 = vmatmul.f32.gmra.mxu0 %v1235
    %v1281 = vpop.f32.mrf.mxu0
    %v1282 = vadd.f32 %v1200, %v1281
    %1283 = vmatmul.f32.gmra.mxu0 %v1238
    %v1284 = vpop.f32.mrf.mxu0
    %v1285 = vadd.f32 %v1200, %v1284
    %1286 = vmatmul.f32.gmra.mxu0 %v1241
    %v1287 = vpop.f32.mrf.mxu0
    %v1288 = vadd.f32 %v1224, %v1287
    %1289 = vmatmul.f32.gmra.mxu0 %v1244
    %v1290 = vpop.f32.mrf.mxu0
    %v1291 = vadd.f32 %v1224, %v1290
    %1292 = vmatmul.f32.gmra.mxu0 %v1247
    %v1293 = vpop.f32.mrf.mxu0
    %v1294 = vadd.f32 %v1224, %v1293
    %1295 = vmatmul.f32.gmra.mxu0 %v1250
    %v1296 = vpop.f32.mrf.mxu0
    %v1297 = vadd.f32 %v1224, %v1296
    %1298 = vmatmul.f32.gmra.mxu0 %v1253
    %v1299 = vpop.f32.mrf.mxu0
    %v1300 = vadd.f32 %v1224, %v1299
    %1301 = vdwg.mxu0
    %v1302 = vld [vmem:[%s12] sm:$0x1]
    %v1304 = vperm.slane %v1302, 0
    %v1306 = vadd.f32 %v1273, %v1304
    %v1307 = vadd.f32 %v1276, %v1304
    %v1308 = vadd.f32 %v1279, %v1304
    %v1309 = vadd.f32 %v1282, %v1304
    %v1310 = vadd.f32 %v1285, %v1304
    %v1311 = vadd.f32 %v1288, %v1304
    %v1312 = vadd.f32 %v1291, %v1304
    %v1313 = vadd.f32 %v1294, %v1304
    %v1314 = vadd.f32 %v1297, %v1304
    %v1315 = vadd.f32 %v1300, %v1304
    %1316 = vst.msk [vmem:[%s13] sm:$0xff] %vm823, %v1306
    %1317 = vst.msk [vmem:[%s13 + $0x8] sm:$0xff] %vm823, %v1307
    %1318 = vst.msk [vmem:[%s13 + $0x10] sm:$0xff] %vm823, %v1308
    %1319 = vst.msk [vmem:[%s13 + $0x18] sm:$0xff] %vm823, %v1309
    %1320 = vst.msk [vmem:[%s13 + $0x20] sm:$0xff] %vm823, %v1310
    %1321 = vst.msk [vmem:[%s13 + $0x28] sm:$0xff] %vm823, %v1311
    %1322 = vst.msk [vmem:[%s13 + $0x30] sm:$0xff] %vm823, %v1312
    %1323 = vst.msk [vmem:[%s13 + $0x38] sm:$0xff] %vm823, %v1313
    %1324 = vst.msk [vmem:[%s13 + $0x40] sm:$0xff] %vm823, %v1314
    %1325 = vst.msk [vmem:[%s13 + $0x48] sm:$0xff] %vm823, %v1315
    %v1326 = vsub.f32 %v1306, %v778
    %v1327 = vsub.f32 %v1307, %v780
    %v1328 = vsub.f32 %v1308, %v782
    %v1329 = vsub.f32 %v1309, %v784
    %v1330 = vsub.f32 %v1310, %v786
    %v1331 = vsub.f32 %v1311, %v788
    %v1332 = vsub.f32 %v1312, %v790
    %v1333 = vsub.f32 %v1313, %v792
    %v1334 = vsub.f32 %v1314, %v794
    %v1335 = vsub.f32 %v1315, %v796
    %v1336 = vand.u32 2147483647, %v1326
    %v1337 = vand.u32 2147483647, %v1327
    %v1338 = vand.u32 2147483647, %v1328
    %v1339 = vand.u32 2147483647, %v1329
    %v1340 = vand.u32 2147483647, %v1330
    %v1341 = vand.u32 2147483647, %v1331
    %v1342 = vand.u32 2147483647, %v1332
    %v1343 = vand.u32 2147483647, %v1333
    %v1344 = vand.u32 2147483647, %v1334
    %v1345 = vand.u32 2147483647, %v1335
    %v1346 = vsel %vm823, %v1336, 0.0
    %v1347 = vsel %vm823, %v1337, 0.0
    %v1348 = vadd.f32 %v1346, %v1347
    %v1349 = vsel %vm823, %v1338, 0.0
    %v1350 = vadd.f32 %v1348, %v1349
    %v1351 = vsel %vm823, %v1339, 0.0
    %v1352 = vadd.f32 %v1350, %v1351
    %v1353 = vsel %vm823, %v1340, 0.0
    %v1354 = vadd.f32 %v1352, %v1353
    %v1355 = vsel %vm823, %v1341, 0.0
    %v1356 = vadd.f32 %v1354, %v1355
    %v1357 = vsel %vm823, %v1342, 0.0
    %v1358 = vadd.f32 %v1356, %v1357
    %v1359 = vsel %vm823, %v1343, 0.0
    %v1360 = vadd.f32 %v1358, %v1359
    %v1361 = vsel %vm823, %v1344, 0.0
    %v1362 = vadd.f32 %v1360, %v1361
    %v1363 = vsel %vm823, %v1345, 0.0
    %v1364 = vadd.f32 %v1362, %v1363
    %1365 = vadd.xlane.f32.xlu0 %v1364
    %v1366 = vpop.xlane.xlu0 %1365
    %v1367 = vrot.slane %v1366, 4
    %v1368 = vadd.f32 %v1366, %v1367
    %v1369 = vrot.slane %v1368, 2
    %v1370 = vadd.f32 %v1368, %v1369
    %v1371 = vrot.slane %v1370, 1
    %v1372 = vadd.f32 %v1370, %v1371
    %s1373 = vtos %v1372
    %v1374 = vrcp.pop 1280.0
    %v1375 = vmul.f32 1280.0, %v1374
    %v1376 = vsub.f32 1.0, %v1375
    %v1377 = vmul.f32 %v1374, %v1376
    %v1378 = vadd.f32 %v1374, %v1377
    %vm1379 = vweird.f32 %v1374
    %v1380 = vsel %vm1379, %v1374, %v1378
    %s1381 = vtos %v1380
    %s1382 = smul.f32 %s1373, %s1381
    %s1383 = smul.f32 %s1382, 10.0
    %v1384 = vmul.f32 %v925, 1.442695
    %v1385 = vpow.pop %v1384
    %v1386 = vmul.f32 %v928, 1.442695
    %v1387 = vpow.pop %v1386
    %v1388 = vmul.f32 %v931, 1.442695
    %v1389 = vpow.pop %v1388
    %v1390 = vmul.f32 %v934, 1.442695
    %v1391 = vpow.pop %v1390
    %v1392 = vmul.f32 %v937, 1.442695
    %v1393 = vpow.pop %v1392
    %v1394 = vmul.f32 %v940, 1.442695
    %v1395 = vpow.pop %v1394
    %v1396 = vmul.f32 %v943, 1.442695
    %v1397 = vpow.pop %v1396
    %v1398 = vmul.f32 %v946, 1.442695
    %v1399 = vpow.pop %v1398
    %v1400 = vmul.f32 %v949, 1.442695
    %v1401 = vpow.pop %v1400
    %v1402 = vmul.f32 %v952, 1.442695
    %v1403 = vpow.pop %v1402
    %v1404 = vmul.f32 %v872, %v872
    %v1405 = vmul.f32 %v875, %v875
    %v1406 = vmul.f32 %v878, %v878
    %v1407 = vmul.f32 %v881, %v881
    %v1408 = vmul.f32 %v884, %v884
    %v1409 = vmul.f32 %v887, %v887
    %v1410 = vmul.f32 %v890, %v890
    %v1411 = vmul.f32 %v893, %v893
    %v1412 = vmul.f32 %v896, %v896
    %v1413 = vmul.f32 %v899, %v899
    %v1414 = vadd.f32 %v1385, %v1404
    %v1415 = vadd.f32 %v1387, %v1405
    %v1416 = vadd.f32 %v1389, %v1406
    %v1417 = vadd.f32 %v1391, %v1407
    %v1418 = vadd.f32 %v1393, %v1408
    %v1419 = vadd.f32 %v1395, %v1409
    %v1420 = vadd.f32 %v1397, %v1410
    %v1421 = vadd.f32 %v1399, %v1411
    %v1422 = vadd.f32 %v1401, %v1412
    %v1423 = vadd.f32 %v1403, %v1413
    %v1424 = vsub.f32 %v1414, 1.0
    %v1425 = vsub.f32 %v1415, 1.0
    %v1426 = vsub.f32 %v1416, 1.0
    %v1427 = vsub.f32 %v1417, 1.0
    %v1428 = vsub.f32 %v1418, 1.0
    %v1429 = vsub.f32 %v1419, 1.0
    %v1430 = vsub.f32 %v1420, 1.0
    %v1431 = vsub.f32 %v1421, 1.0
    %v1432 = vsub.f32 %v1422, 1.0
    %v1433 = vsub.f32 %v1423, 1.0
    %v1434 = vsub.f32 %v1424, %v925
    %v1435 = vsub.f32 %v1425, %v928
    %v1436 = vsub.f32 %v1426, %v931
    %v1437 = vsub.f32 %v1427, %v934
    %v1438 = vsub.f32 %v1428, %v937
    %v1439 = vsub.f32 %v1429, %v940
    %v1440 = vsub.f32 %v1430, %v943
    %v1441 = vsub.f32 %v1431, %v946
    %v1442 = vsub.f32 %v1432, %v949
    %v1443 = vsub.f32 %v1433, %v952
    %v1444 = vsel %vm1087, %v1434, 0.0
    %v1445 = vsel %vm1087, %v1435, 0.0
    %v1446 = vadd.f32 %v1444, %v1445
    %v1447 = vsel %vm1087, %v1436, 0.0
    %v1448 = vadd.f32 %v1446, %v1447
    %v1449 = vsel %vm1087, %v1437, 0.0
    %v1450 = vadd.f32 %v1448, %v1449
    %v1451 = vsel %vm1087, %v1438, 0.0
    %v1452 = vadd.f32 %v1450, %v1451
    %v1453 = vsel %vm1087, %v1439, 0.0
    %v1454 = vadd.f32 %v1452, %v1453
    %v1455 = vsel %vm1087, %v1440, 0.0
    %v1456 = vadd.f32 %v1454, %v1455
    %v1457 = vsel %vm1087, %v1441, 0.0
    %v1458 = vadd.f32 %v1456, %v1457
    %v1459 = vsel %vm1087, %v1442, 0.0
    %v1460 = vadd.f32 %v1458, %v1459
    %v1461 = vsel %vm1087, %v1443, 0.0
    %v1462 = vadd.f32 %v1460, %v1461
    %1463 = vadd.xlane.f32.xlu0 %v1462
    %v1464 = vpop.xlane.xlu0 %1463
    %v1465 = vrot.slane %v1464, 4
    %v1466 = vadd.f32 %v1464, %v1465
    %v1467 = vrot.slane %v1466, 2
    %v1468 = vadd.f32 %v1466, %v1467
    %v1469 = vrot.slane %v1468, 1
    %v1470 = vadd.f32 %v1468, %v1469
    %s1471 = vtos %v1470
    %v1472 = vrcp.pop 2560.0
    %v1473 = vmul.f32 2560.0, %v1472
    %v1474 = vsub.f32 1.0, %v1473
    %v1475 = vmul.f32 %v1472, %v1474
    %v1476 = vadd.f32 %v1472, %v1475
    %vm1477 = vweird.f32 %v1472
    %v1478 = vsel %vm1477, %v1472, %v1476
    %s1479 = vtos %v1478
    %s1480 = smul.f32 %s1471, %s1479
    %s1481 = smul.f32 %s1480, 0.5
    %s1482 = sadd.f32 %s1383, %s1481
    %v1483 = vmul.f32 %v1110, %v1142
    %vm1484 = vcmask 253952
    %v1485 = vsel %vm1484, %v1483, 0.0
    %1486 = vadd.xlane.f32.xlu0 %v1485
    %v1487 = vpop.xlane.xlu0 %1486
    %v1488 = vrot.slane %v1487, 4
    %v1489 = vadd.f32 %v1487, %v1488
    %v1490 = vrot.slane %v1489, 2
    %v1491 = vadd.f32 %v1489, %v1490
    %v1492 = vrot.slane %v1491, 1
    %v1493 = vadd.f32 %v1491, %v1492
    %s1494 = vtos %v1493
    %v1495 = vmul.f32 %v1110, %v1110
    %v1496 = vsel %vm1484, %v1495, 0.0
    %1497 = vadd.xlane.f32.xlu0 %v1496
    %v1498 = vpop.xlane.xlu0 %1497
    %v1499 = vrot.slane %v1498, 4
    %v1500 = vadd.f32 %v1498, %v1499
    %v1501 = vrot.slane %v1500, 2
    %v1502 = vadd.f32 %v1500, %v1501
    %v1503 = vrot.slane %v1502, 1
    %v1504 = vadd.f32 %v1502, %v1503
    %s1505 = vtos %v1504
    %v1506 = vmul.f32 %v1142, %v1142
    %v1507 = vsel %vm1484, %v1506, 0.0
    %1508 = vadd.xlane.f32.xlu0 %v1507
    %v1509 = vpop.xlane.xlu0 %1508
    %v1510 = vrot.slane %v1509, 4
    %v1511 = vadd.f32 %v1509, %v1510
    %v1512 = vrot.slane %v1511, 2
    %v1513 = vadd.f32 %v1511, %v1512
    %v1514 = vrot.slane %v1513, 1
    %v1515 = vadd.f32 %v1513, %v1514
    %s1516 = vtos %v1515
    %s1517 = smul.f32 %s1505, %s1516
    %s1518 = smax.f32 %s1517, 1e-16
    %v1519 = vstv %s1518
    %v1520 = vrsqrt.pop %v1519
    %v1521 = vmul.f32 %v1520, %v1519
    %v1522 = vmul.f32 %v1521, %v1520
    %v1523 = vmul.f32 0.5, %v1522
    %v1524 = vsub.f32 1.5, %v1523
    %v1525 = vmul.f32 %v1520, %v1524
    %vm1526 = vweird.f32 %v1519
    %vm1527 = vweird.f32 %v1520
    %vm1528 = vmor %vm1526, %vm1527
    %v1529 = vsel %vm1528, %v1520, %v1525
    %s1530 = vtos %v1529
    %s1531 = smul.f32 %s1494, %s1530
    %s1532 = ssub.f32 1.0, %s1531
    %s1533 = sadd.f32 %s1532, 0.0
    %v1534 = vmul.f32 %v1126, %v1158
    %v1535 = vsel %vm1484, %v1534, 0.0
    %1536 = vadd.xlane.f32.xlu0 %v1535
    %v1537 = vpop.xlane.xlu0 %1536
    %v1538 = vrot.slane %v1537, 4
    %v1539 = vadd.f32 %v1537, %v1538
    %v1540 = vrot.slane %v1539, 2
    %v1541 = vadd.f32 %v1539, %v1540
    %v1542 = vrot.slane %v1541, 1
    %v1543 = vadd.f32 %v1541, %v1542
    %s1544 = vtos %v1543
    %v1545 = vmul.f32 %v1126, %v1126
    %v1546 = vsel %vm1484, %v1545, 0.0
    %1547 = vadd.xlane.f32.xlu0 %v1546
    %v1548 = vpop.xlane.xlu0 %1547
    %v1549 = vrot.slane %v1548, 4
    %v1550 = vadd.f32 %v1548, %v1549
    %v1551 = vrot.slane %v1550, 2
    %v1552 = vadd.f32 %v1550, %v1551
    %v1553 = vrot.slane %v1552, 1
    %v1554 = vadd.f32 %v1552, %v1553
    %s1555 = vtos %v1554
    %v1556 = vmul.f32 %v1158, %v1158
    %v1557 = vsel %vm1484, %v1556, 0.0
    %1558 = vadd.xlane.f32.xlu0 %v1557
    %v1559 = vpop.xlane.xlu0 %1558
    %v1560 = vrot.slane %v1559, 4
    %v1561 = vadd.f32 %v1559, %v1560
    %v1562 = vrot.slane %v1561, 2
    %v1563 = vadd.f32 %v1561, %v1562
    %v1564 = vrot.slane %v1563, 1
    %v1565 = vadd.f32 %v1563, %v1564
    %s1566 = vtos %v1565
    %s1567 = smul.f32 %s1555, %s1566
    %s1568 = smax.f32 %s1567, 1e-16
    %v1569 = vstv %s1568
    %v1570 = vrsqrt.pop %v1569
    %v1571 = vmul.f32 %v1570, %v1569
    %v1572 = vmul.f32 %v1571, %v1570
    %v1573 = vmul.f32 0.5, %v1572
    %v1574 = vsub.f32 1.5, %v1573
    %v1575 = vmul.f32 %v1570, %v1574
    %vm1576 = vweird.f32 %v1569
    %vm1577 = vweird.f32 %v1570
    %vm1578 = vmor %vm1576, %vm1577
    %v1579 = vsel %vm1578, %v1570, %v1575
    %s1580 = vtos %v1579
    %s1581 = smul.f32 %s1544, %s1580
    %s1582 = ssub.f32 1.0, %s1581
    %s1583 = sadd.f32 %s1533, %s1582
    %v1584 = vrcp.pop 2.0
    %v1585 = vmul.f32 2.0, %v1584
    %v1586 = vsub.f32 1.0, %v1585
    %v1587 = vmul.f32 %v1584, %v1586
    %v1588 = vadd.f32 %v1584, %v1587
    %vm1589 = vweird.f32 %v1584
    %v1590 = vsel %vm1589, %v1584, %v1588
    %s1591 = vtos %v1590
    %s1592 = smul.f32 %s1583, %s1591
    %s1593 = sadd.f32 %s1482, %s1592
    %v1594 = vstv %s1593
    %vm1595 = vcmask 0
    %1596 = vst.msk [vmem:[#allocation2] sm:$0x1] %vm1595, %v1594
    // Predicated region
    $region54: #{vc_forward.1} parent=1 // pred_check
      _
    $region55: #{vc_forward.1} parent=1 // pred_check_branch
      %1598 = sbr.rel (0) target = $region57
    $region56: #{vc_forward.1} parent=1 // pred_region
      _
    $region57: #{vc_forward.1} parent=1 // pred_fallthru
      _
    // Predicated region
    $region58: #{vc_forward.1} parent=1 // pred_check
      _
    $region59: #{vc_forward.1} parent=1 // pred_check_branch
      %1600 = sbr.rel (0) target = $region61
    $region60: #{vc_forward.1} parent=1 // pred_region
      %1602 = vsyncadd [#allocation3], 0
      %s1604 = sshll.u32 [#allocation2], 4
      %s1605 = int_to_ptr.vmem [resolvable:$true] %s1604
      %s1606 = sshll.u32 %s14, 4
      %s1607 = int_to_ptr.hbm [resolvable:$true] %s1606
      %1609 = dma.vmem_to_hbm [thread:$0]  %s1605, 16, %s1607, [#allocation3]
    $region61: #{vc_forward.1} parent=1 // pred_fallthru
      _
    // Predicated region
    $region62: #{vc_forward.1} parent=1 // pred_check
      _
    $region63: #{vc_forward.1} parent=1 // pred_check_branch
      %1611 = sbr.rel (0) target = $region65
    $region64: #{vc_forward.1} parent=1 // pred_region
      _
    $region65: #{vc_forward.1} parent=1 // pred_fallthru
      _
    // Predicated region
    $region66: #{vc_forward.1} parent=1 // pred_check
      _
    $region67: #{vc_forward.1} parent=1 // pred_check_branch
      %1613 = sbr.rel (0) target = $region69
    $region68: #{vc_forward.1} parent=1 // pred_region
      %1615 = dma.done [#allocation3], 16
    $region69: #{vc_forward.1} parent=1 // pred_fallthru
      _
    %1616 = vsyncpa [#allocation3], 1

</llo_original>
